<compile_context>
chip_gen: v7x
topology: tpu7x:2x2x1
jax: 0.10.0
libtpu: 0.0.40
codegen_flags: <defaults>
</compile_context>

<pallas_src>
import functools

import jax
import jax.numpy as jnp
import numpy as np
from jax import lax
from jax.experimental import pallas as pl
from jax.experimental.pallas import tpu as pltpu

EPS = 1e-5


# ----------------------------------------------------------------------------------
# In-kernel building blocks
# ----------------------------------------------------------------------------------
def _shifted_taps(h, K):
    """K shifted copies of h along the length axis, zero-padded at the ends.

    tap[k][:, l, :] == h[:, l + k - P, :]   (0 where l + k - P is out of range)

    Built with static XLU sublane rolls + one VPU compare/select per tap instead of a
    halo pad-concat followed by sublane-misaligned length slices (review item 3).
    Kept in f32: 32-bit sublane rotates are the native case and v5e has no bf16 VPU.
    """
    B, L, C = h.shape
    P = (K - 1) // 2
    pos = lax.broadcasted_iota(jnp.int32, (B, L, C), 1)   # row index l, hoisted per layer
    taps = []
    for k in range(K):
        s = k - P                                         # this tap reads h[:, l + s, :]
        if s == 0:
            taps.append(h)
            continue
        rolled = pltpu.roll(h, (-s) % L, axis=1)          # rolled[:, l, :] = h[:, (l+s)%L, :]
        valid = (pos >= -s) if s < 0 else (pos < L - s)   # kill the wrapped rows
        taps.append(jnp.where(valid, rolled, 0.0))
    return taps


def _bn_relu(z, gamma, beta):
    """Training-mode BatchNorm1d + ReLU over (rows, C) activations, all f32.

    Batch stats are the biased moments over every row (B*L), exactly what a fresh
    torch module's forward() computes.  Two-pass variance (centre first) avoids the
    E[z^2]-mean^2 cancellation flagged in the review.  The conv bias is a per-channel
    constant, so it cancels exactly under batch-stats BN and is omitted here.
    # TODO(synk): eval-mode BN (running stats) would need the conv bias re-added and
    # the stored mean/var passed in instead of the batch moments.
    """
    mean = jnp.mean(z, axis=0, keepdims=True)
    zc = z - mean
    var = jnp.mean(zc * zc, axis=0, keepdims=True)
    scale = gamma * lax.rsqrt(var + EPS)                  # EUP rsqrt, f32
    return jnp.maximum(zc * scale + beta, 0.0)


def _conv_bn_relu(h, w_ref, gamma, beta, K):
    """conv1d(K, 'same') -> BN(train) -> ReLU for channels-last f32 activations.

    The K taps are lane-concatenated (offsets are multiples of 128 because Cin is
    128/256) into one (B*L, K*Cin) bf16 im2col tile; the whole layer is a single MXU
    matmul with f32 accumulation.
    """
    B, L, cin = h.shape
    taps = _shifted_taps(h, K)
    tile = jnp.concatenate([t.astype(jnp.bfloat16) for t in taps], axis=-1)
    z = jnp.dot(tile.reshape(B * L, K * cin), w_ref[...],
                preferred_element_type=jnp.float32)       # (B*L, Cout) f32
    return _bn_relu(z, gamma, beta).reshape(B, L, -1)


def _fcn_kernel(x1_ref, w1f_ref, w2_ref, w3_ref, bnp_ref, out_ref, *, B, L):
    f32 = jnp.float32

    # Packed per-channel params: one small ref instead of nine tiny DMAs (item 5).
    g1, be1 = bnp_ref[0:1, 0:128], bnp_ref[1:2, 0:128]
    g2, be2 = bnp_ref[2:3, :], bnp_ref[3:4, :]
    g3, be3 = bnp_ref[4:5, 0:128], bnp_ref[5:6, 0:128]
    b_fc = bnp_ref[6:7, 0:128]

    # Layer 1: the input arrives as a lane-dense zero-padded im2col slab, so the whole
    # conv is a single 128-contraction matmul (item 2).
    z1 = jnp.dot(x1_ref[...], w1f_ref[0], preferred_element_type=f32)   # (B*L, 128)
    h1 = _bn_relu(z1, g1, be1).reshape(B, L, 128)

    # Layers 2 & 3: roll-based im2col, one matmul each (contraction 640 / 1280).
    h2 = _conv_bn_relu(h1, w2_ref, g2, be2, K=5)          # (B, L, 256)
    h3 = _conv_bn_relu(h2, w3_ref, g3, be3, K=5)          # (B, L, 128)

    # AdaptiveMaxPool1d(1): one reduce over the length axis.
    pooled = jnp.max(h3, axis=1)                          # (B, 128) f32

    # linear1 and linear2 fused in the wrapper (item 1): a single dot + bias,
    # written lane-dense to the (B, 128) output.
    out_ref[...] = jnp.dot(pooled.astype(jnp.bfloat16), w1f_ref[1],
                           preferred_element_type=f32) + b_fc


# ----------------------------------------------------------------------------------
# Wrapper
# ----------------------------------------------------------------------------------
def _pack_params(params, num_classes):
    """Pre-cast / pre-pad / fuse the parameter tensors into 4 kernel operands.

    Pure parameter prep — callers reusing the same params should hoist this out of the
    per-step trace (review item 5).
    """
    ncls_pad = 128
    assert num_classes <= ncls_pad, "classifier is packed into 128 output lanes"

    def conv_w(w, pad_rows=None):
        K, ci, co = w.shape                   # row order k*Cin + c matches the im2col tiles
        wf = w.reshape(K * ci, co)
        if pad_rows is not None:
            wf = jnp.pad(wf, ((0, pad_rows - K * ci), (0, 0)))
        return wf.astype(jnp.bfloat16)

    # Fuse linear1 -> linear2 in f32 (exact: no nonlinearity between them) and lane-pad
    # the classifier to 128 so the kernel output is lane-dense (item 1).
    wl2 = jnp.pad(params["wl2"], ((0, 0), (0, ncls_pad - num_classes)))
    bl2 = jnp.pad(params["bl2"], ((0, 0), (0, ncls_pad - num_classes)))
    w_fc = jnp.dot(params["wl1"], wl2)                        # (128, 128) f32
    b_fc = jnp.dot(params["bl1"], wl2) + bl2                  # (1, 128)  f32

    # w1 (zero-padded to a 128x128 granule) and the fused linear weight share one ref.
    w1f = jnp.stack([conv_w(params["w1"], pad_rows=128),
                     w_fc.astype(jnp.bfloat16)])              # (2, 128, 128) bf16

    # All per-channel vectors in one (8, 256) f32 slab:
    # rows = g1, be1, g2, be2, g3, be3, fused-linear bias, (unused).
    def row(v):
        v = jnp.asarray(v, jnp.float32).reshape(-1)
        return jnp.pad(v, (0, 256 - v.shape[0]))

    bnp = jnp.stack([row(params["g1"]), row(params["be1"]),
                     row(params["g2"]), row(params["be2"]),
                     row(params["g3"]), row(params["be3"]),
                     row(b_fc), jnp.zeros((256,), jnp.float32)])   # (8, 256) f32

    return w1f, conv_w(params["w2"]), conv_w(params["w3"]), bnp


def basic_fcn_forward(x_ncl, params):
    """x_ncl: (B, C_in, L) float32, like the PyTorch Conv1d input. Returns (B, num_classes)."""
    B, cin, L = x_ncl.shape
    num_classes = params["wl2"].shape[1]
    K1 = params["w1"].shape[0]
    P1 = (K1 - 1) // 2

    # Input layout plumbing: NCL -> channels-last -> first-layer im2col slab.  conv1
    # has Cin=4, so its taps can never be lane-aligned; building the zero-padded
    # (B*L, K1*Cin=36 -> 128) slab here (a ~16 KiB rearrangement of the raw input)
    # keeps sub-128-lane concats out of the kernel and makes layer 1 a single matmul.
    x = jnp.transpose(x_ncl, (0, 2, 1)).astype(jnp.float32)           # (B, L, Cin)
    xp = jnp.pad(x, ((0, 0), (P1, P1), (0, 0)))
    x1 = jnp.concatenate([xp[:, k:k + L, :] for k in range(K1)], axis=-1)
    x1 = jnp.pad(x1, ((0, 0), (0, 0), (0, 128 - K1 * cin)))
    x1 = x1.reshape(B * L, 128).astype(jnp.bfloat16)

    w1f, w2, w3, bnp = _pack_params(params, num_classes)

    vmem = pl.BlockSpec(memory_space=pltpu.MemorySpace.VMEM)
    out = pl.pallas_call(
        functools.partial(_fcn_kernel, B=B, L=L),
        out_shape=jax.ShapeDtypeStruct((B, 128), jnp.float32),        # lane-dense output
        in_specs=[vmem] * 5,
        out_specs=vmem,
        compiler_params=pltpu.CompilerParams(vmem_limit_bytes=32 * 1024 * 1024),
    )(x1, w1f, w2, w3, bnp)
    return out[:, :num_classes]


# ----------------------------------------------------------------------------------
# Init + pure-JAX reference (unfused, all-f32) for correctness checking
# ----------------------------------------------------------------------------------
def init_params(key, input_dims, num_classes):
    """Deterministic init mirroring the torch module (kaiming_normal_, zero biases)."""
    ks = jax.random.split(key, 5)

    def kaiming(k, shape, fan_in):
        return jnp.sqrt(2.0 / fan_in) * jax.random.normal(k, shape, jnp.float32)

    p = {}
    # conv weights stored as (K, Cin, Cout); fan_in = Cin * K (torch default, fan_in mode)
    p["w1"] = kaiming(ks[0], (9, input_dims, 128), input_dims * 9)
    p["b1"] = jnp.zeros((1, 128), jnp.float32)
    p["g1"] = jnp.ones((1, 128), jnp.float32)
    p["be1"] = jnp.zeros((1, 128), jnp.float32)

    p["w2"] = kaiming(ks[1], (5, 128, 256), 128 * 5)
    p["b2"] = jnp.zeros((1, 256), jnp.float32)
    p["g2"] = jnp.ones((1, 256), jnp.float32)
    p["be2"] = jnp.zeros((1, 256), jnp.float32)

    p["w3"] = kaiming(ks[2], (5, 256, 128), 256 * 5)
    p["b3"] = jnp.zeros((1, 128), jnp.float32)
    p["g3"] = jnp.ones((1, 128), jnp.float32)
    p["be3"] = jnp.zeros((1, 128), jnp.float32)

    # linear weights stored as (in, out); fan_in = in_features
    p["wl1"] = kaiming(ks[3], (128, 128), 128)
    p["bl1"] = jnp.zeros((1, 128), jnp.float32)
    p["wl2"] = kaiming(ks[4], (128, num_classes), 128)
    p["bl2"] = jnp.zeros((1, num_classes), jnp.float32)
    return p


def reference_forward(x_ncl, p):
    """Pure-JAX f32 reference of the same math (conv bias included, linears unfused)."""
    x = jnp.transpose(x_ncl, (0, 2, 1)).astype(jnp.float32)   # (B, L, Cin)

    def conv(h, w, b, pad):
        out = lax.conv_general_dilated(
            h, w, window_strides=(1,), padding=[(pad, pad)],
            dimension_numbers=("NWC", "WIO", "NWC"),
            precision=lax.Precision.HIGHEST)
        return out + b

    def bn_relu(h, g, be):
        mean = jnp.mean(h, axis=(0, 1), keepdims=True)
        var = jnp.mean((h - mean) ** 2, axis=(0, 1), keepdims=True)
        return jnp.maximum((h - mean) * lax.rsqrt(var + EPS) * g + be, 0.0)

    h = bn_relu(conv(x, p["w1"], p["b1"], 4), p["g1"], p["be1"])
    h = bn_relu(conv(h, p["w2"], p["b2"], 2), p["g2"], p["be2"])
    h = bn_relu(conv(h, p["w3"], p["b3"], 2), p["g3"], p["be3"])
    pooled = jnp.max(h, axis=1)
    f1 = jnp.dot(pooled, p["wl1"], precision=lax.Precision.HIGHEST) + p["bl1"]
    return jnp.dot(f1, p["wl2"], precision=lax.Precision.HIGHEST) + p["bl2"]


if __name__ == "__main__":
    B, C_IN, LENGTH, NUM_CLASSES = 2, 4, 16, 10

    key = jax.random.PRNGKey(0)
    kx, kp = jax.random.split(key)
    x = jax.random.normal(kx, (B, C_IN, LENGTH), jnp.float32)   # NCL, like torch Conv1d
    params = init_params(kp, C_IN, NUM_CLASSES)

    fwd = jax.jit(basic_fcn_forward)
    out = jax.block_until_ready(fwd(x, params))
    ref = jax.block_until_ready(reference_forward(x, params))

    assert out.shape == (B, NUM_CLASSES)
    # Tolerance sized for bf16 MXU operands vs. an all-f32 reference.
    np.testing.assert_allclose(np.asarray(out), np.asarray(ref), rtol=5e-2, atol=5e-2)
    print("KERNEL_OK")
</pallas_src>

<mosaic_0001>
module attributes {stable_mosaic.version = 11 : i64} {
  func.func @_fcn_kernel(%arg0: memref<32x128xbf16, #tpu.memory_space<vmem>>, %arg1: memref<2x128x128xbf16, #tpu.memory_space<vmem>>, %arg2: memref<640x256xbf16, #tpu.memory_space<vmem>>, %arg3: memref<1280x128xbf16, #tpu.memory_space<vmem>>, %arg4: memref<8x256xf32, #tpu.memory_space<vmem>>, %arg5: memref<2x128xf32, #tpu.memory_space<vmem>>) attributes {dimension_semantics = [], scalar_prefetch = 0 : i64, scratch_operands = 0 : i64, tpu.core_type = #tpu.core_type<tc>} {
    %c0 = arith.constant 0 : index
    %c0_0 = arith.constant 0 : index
    %0 = vector.load %arg4[%c0, %c0_0] : memref<8x256xf32, #tpu.memory_space<vmem>>, vector<1x128xf32>
    %c1 = arith.constant 1 : index
    %c0_1 = arith.constant 0 : index
    %1 = vector.load %arg4[%c1, %c0_1] : memref<8x256xf32, #tpu.memory_space<vmem>>, vector<1x128xf32>
    %c2 = arith.constant 2 : index
    %c0_2 = arith.constant 0 : index
    %2 = vector.load %arg4[%c2, %c0_2] : memref<8x256xf32, #tpu.memory_space<vmem>>, vector<1x256xf32>
    %c3 = arith.constant 3 : index
    %c0_3 = arith.constant 0 : index
    %3 = vector.load %arg4[%c3, %c0_3] : memref<8x256xf32, #tpu.memory_space<vmem>>, vector<1x256xf32>
    %c4 = arith.constant 4 : index
    %c0_4 = arith.constant 0 : index
    %4 = vector.load %arg4[%c4, %c0_4] : memref<8x256xf32, #tpu.memory_space<vmem>>, vector<1x128xf32>
    %c5 = arith.constant 5 : index
    %c0_5 = arith.constant 0 : index
    %5 = vector.load %arg4[%c5, %c0_5] : memref<8x256xf32, #tpu.memory_space<vmem>>, vector<1x128xf32>
    %c6 = arith.constant 6 : index
    %c0_6 = arith.constant 0 : index
    %6 = vector.load %arg4[%c6, %c0_6] : memref<8x256xf32, #tpu.memory_space<vmem>>, vector<1x128xf32>
    %c0_7 = arith.constant 0 : index
    %c0_8 = arith.constant 0 : index
    %7 = vector.load %arg0[%c0_7, %c0_8] : memref<32x128xbf16, #tpu.memory_space<vmem>>, vector<32x128xbf16>
    %c0_9 = arith.constant 0 : index
    %c0_10 = arith.constant 0 : index
    %c0_11 = arith.constant 0 : index
    %8 = vector.load %arg1[%c0_9, %c0_10, %c0_11] : memref<2x128x128xbf16, #tpu.memory_space<vmem>>, vector<1x128x128xbf16>
    %9 = vector.shape_cast %8 : vector<1x128x128xbf16> to vector<128x128xbf16>
    %cst = arith.constant dense<0.000000e+00> : vector<32x128xf32>
    %10 = tpu.matmul %7, %9, %cst {dimension_numbers = #tpu.dot_dimension_numbers<[1], [0], [0], [1], [0, 0, 1, 1], [], []>} : vector<32x128xbf16>, vector<128x128xbf16>, vector<32x128xf32> -> vector<32x128xf32>
    %cst_12 = arith.constant dense<0.000000e+00> : vector<128xf32>
    %11 = vector.multi_reduction <add>, %10, %cst_12 [0] : vector<32x128xf32> to vector<128xf32>
    %12 = vector.shape_cast %11 : vector<128xf32> to vector<1x128xf32>
    %cst_13 = arith.constant 3.200000e+01 : f32
    %13 = vector.broadcast %cst_13 : f32 to vector<1x128xf32>
    %14 = arith.divf %12, %13 : vector<1x128xf32>
    %15 = vector.broadcast %14 : vector<1x128xf32> to vector<32x128xf32>
    %16 = arith.subf %10, %15 : vector<32x128xf32>
    %17 = arith.mulf %16, %16 : vector<32x128xf32>
    %cst_14 = arith.constant dense<0.000000e+00> : vector<128xf32>
    %18 = vector.multi_reduction <add>, %17, %cst_14 [0] : vector<32x128xf32> to vector<128xf32>
    %19 = vector.shape_cast %18 : vector<128xf32> to vector<1x128xf32>
    %cst_15 = arith.constant 3.200000e+01 : f32
    %20 = vector.broadcast %cst_15 : f32 to vector<1x128xf32>
    %21 = arith.divf %19, %20 : vector<1x128xf32>
    %cst_16 = arith.constant 9.99999974E-6 : f32
    %22 = vector.broadcast %cst_16 : f32 to vector<1x128xf32>
    %23 = arith.addf %21, %22 : vector<1x128xf32>
    %24 = math.rsqrt %23 : vector<1x128xf32>
    %25 = arith.mulf %0, %24 : vector<1x128xf32>
    %26 = vector.broadcast %25 : vector<1x128xf32> to vector<32x128xf32>
    %27 = arith.mulf %16, %26 : vector<32x128xf32>
    %28 = vector.broadcast %1 : vector<1x128xf32> to vector<32x128xf32>
    %29 = arith.addf %27, %28 : vector<32x128xf32>
    %cst_17 = arith.constant 0.000000e+00 : f32
    %30 = vector.broadcast %cst_17 : f32 to vector<32x128xf32>
    %31 = arith.maximumf %29, %30 : vector<32x128xf32>
    %32 = vector.shape_cast %31 : vector<32x128xf32> to vector<2x16x128xf32>
    %33 = tpu.iota {dimensions = array<i32: 1>} : vector<2x16x128xi32>
    %c2_i32 = arith.constant 2 : i32
    %34 = tpu.dynamic_rotate %32 by %c2_i32 dim 1 : vector<2x16x128xf32>, i32 -> vector<2x16x128xf32>
    %c2_i32_18 = arith.constant 2 : i32
    %35 = vector.broadcast %c2_i32_18 : i32 to vector<2x16x128xi32>
    %36 = arith.cmpi sge, %33, %35 : vector<2x16x128xi32>
    %cst_19 = arith.constant 0.000000e+00 : f32
    %37 = vector.broadcast %cst_19 : f32 to vector<2x16x128xf32>
    %38 = arith.select %36, %34, %37 : vector<2x16x128xi1>, vector<2x16x128xf32>
    %c1_i32 = arith.constant 1 : i32
    %39 = tpu.dynamic_rotate %32 by %c1_i32 dim 1 : vector<2x16x128xf32>, i32 -> vector<2x16x128xf32>
    %c1_i32_20 = arith.constant 1 : i32
    %40 = vector.broadcast %c1_i32_20 : i32 to vector<2x16x128xi32>
    %41 = arith.cmpi sge, %33, %40 : vector<2x16x128xi32>
    %cst_21 = arith.constant 0.000000e+00 : f32
    %42 = vector.broadcast %cst_21 : f32 to vector<2x16x128xf32>
    %43 = arith.select %41, %39, %42 : vector<2x16x128xi1>, vector<2x16x128xf32>
    %c15_i32 = arith.constant 15 : i32
    %44 = tpu.dynamic_rotate %32 by %c15_i32 dim 1 : vector<2x16x128xf32>, i32 -> vector<2x16x128xf32>
    %c15_i32_22 = arith.constant 15 : i32
    %45 = vector.broadcast %c15_i32_22 : i32 to vector<2x16x128xi32>
    %46 = arith.cmpi slt, %33, %45 : vector<2x16x128xi32>
    %cst_23 = arith.constant 0.000000e+00 : f32
    %47 = vector.broadcast %cst_23 : f32 to vector<2x16x128xf32>
    %48 = arith.select %46, %44, %47 : vector<2x16x128xi1>, vector<2x16x128xf32>
    %c14_i32 = arith.constant 14 : i32
    %49 = tpu.dynamic_rotate %32 by %c14_i32 dim 1 : vector<2x16x128xf32>, i32 -> vector<2x16x128xf32>
    %c14_i32_24 = arith.constant 14 : i32
    %50 = vector.broadcast %c14_i32_24 : i32 to vector<2x16x128xi32>
    %51 = arith.cmpi slt, %33, %50 : vector<2x16x128xi32>
    %cst_25 = arith.constant 0.000000e+00 : f32
    %52 = vector.broadcast %cst_25 : f32 to vector<2x16x128xf32>
    %53 = arith.select %51, %49, %52 : vector<2x16x128xi1>, vector<2x16x128xf32>
    %54 = arith.truncf %38 : vector<2x16x128xf32> to vector<2x16x128xbf16>
    %55 = arith.truncf %43 : vector<2x16x128xf32> to vector<2x16x128xbf16>
    %56 = arith.truncf %32 : vector<2x16x128xf32> to vector<2x16x128xbf16>
    %57 = arith.truncf %48 : vector<2x16x128xf32> to vector<2x16x128xbf16>
    %58 = arith.truncf %53 : vector<2x16x128xf32> to vector<2x16x128xbf16>
    %59 = tpu.concatenate %54, %55, %56, %57, %58 in 2 : vector<2x16x128xbf16>, vector<2x16x128xbf16>, vector<2x16x128xbf16>, vector<2x16x128xbf16>, vector<2x16x128xbf16> -> vector<2x16x640xbf16>
    %60 = vector.shape_cast %59 : vector<2x16x640xbf16> to vector<32x640xbf16>
    %c0_26 = arith.constant 0 : index
    %c0_27 = arith.constant 0 : index
    %61 = vector.load %arg2[%c0_26, %c0_27] : memref<640x256xbf16, #tpu.memory_space<vmem>>, vector<640x256xbf16>
    %cst_28 = arith.constant dense<0.000000e+00> : vector<32x256xf32>
    %62 = tpu.matmul %60, %61, %cst_28 {dimension_numbers = #tpu.dot_dimension_numbers<[1], [0], [0], [1], [0, 0, 1, 1], [], []>} : vector<32x640xbf16>, vector<640x256xbf16>, vector<32x256xf32> -> vector<32x256xf32>
    %cst_29 = arith.constant dense<0.000000e+00> : vector<256xf32>
    %63 = vector.multi_reduction <add>, %62, %cst_29 [0] : vector<32x256xf32> to vector<256xf32>
    %64 = vector.shape_cast %63 : vector<256xf32> to vector<1x256xf32>
    %cst_30 = arith.constant 3.200000e+01 : f32
    %65 = vector.broadcast %cst_30 : f32 to vector<1x256xf32>
    %66 = arith.divf %64, %65 : vector<1x256xf32>
    %67 = vector.broadcast %66 : vector<1x256xf32> to vector<32x256xf32>
    %68 = arith.subf %62, %67 : vector<32x256xf32>
    %69 = arith.mulf %68, %68 : vector<32x256xf32>
    %cst_31 = arith.constant dense<0.000000e+00> : vector<256xf32>
    %70 = vector.multi_reduction <add>, %69, %cst_31 [0] : vector<32x256xf32> to vector<256xf32>
    %71 = vector.shape_cast %70 : vector<256xf32> to vector<1x256xf32>
    %cst_32 = arith.constant 3.200000e+01 : f32
    %72 = vector.broadcast %cst_32 : f32 to vector<1x256xf32>
    %73 = arith.divf %71, %72 : vector<1x256xf32>
    %cst_33 = arith.constant 9.99999974E-6 : f32
    %74 = vector.broadcast %cst_33 : f32 to vector<1x256xf32>
    %75 = arith.addf %73, %74 : vector<1x256xf32>
    %76 = math.rsqrt %75 : vector<1x256xf32>
    %77 = arith.mulf %2, %76 : vector<1x256xf32>
    %78 = vector.broadcast %77 : vector<1x256xf32> to vector<32x256xf32>
    %79 = arith.mulf %68, %78 : vector<32x256xf32>
    %80 = vector.broadcast %3 : vector<1x256xf32> to vector<32x256xf32>
    %81 = arith.addf %79, %80 : vector<32x256xf32>
    %cst_34 = arith.constant 0.000000e+00 : f32
    %82 = vector.broadcast %cst_34 : f32 to vector<32x256xf32>
    %83 = arith.maximumf %81, %82 : vector<32x256xf32>
    %84 = vector.shape_cast %83 : vector<32x256xf32> to vector<2x16x256xf32>
    %85 = tpu.iota {dimensions = array<i32: 1>} : vector<2x16x256xi32>
    %c2_i32_35 = arith.constant 2 : i32
    %86 = tpu.dynamic_rotate %84 by %c2_i32_35 dim 1 : vector<2x16x256xf32>, i32 -> vector<2x16x256xf32>
    %c2_i32_36 = arith.constant 2 : i32
    %87 = vector.broadcast %c2_i32_36 : i32 to vector<2x16x256xi32>
    %88 = arith.cmpi sge, %85, %87 : vector<2x16x256xi32>
    %cst_37 = arith.constant 0.000000e+00 : f32
    %89 = vector.broadcast %cst_37 : f32 to vector<2x16x256xf32>
    %90 = arith.select %88, %86, %89 : vector<2x16x256xi1>, vector<2x16x256xf32>
    %c1_i32_38 = arith.constant 1 : i32
    %91 = tpu.dynamic_rotate %84 by %c1_i32_38 dim 1 : vector<2x16x256xf32>, i32 -> vector<2x16x256xf32>
    %c1_i32_39 = arith.constant 1 : i32
    %92 = vector.broadcast %c1_i32_39 : i32 to vector<2x16x256xi32>
    %93 = arith.cmpi sge, %85, %92 : vector<2x16x256xi32>
    %cst_40 = arith.constant 0.000000e+00 : f32
    %94 = vector.broadcast %cst_40 : f32 to vector<2x16x256xf32>
    %95 = arith.select %93, %91, %94 : vector<2x16x256xi1>, vector<2x16x256xf32>
    %c15_i32_41 = arith.constant 15 : i32
    %96 = tpu.dynamic_rotate %84 by %c15_i32_41 dim 1 : vector<2x16x256xf32>, i32 -> vector<2x16x256xf32>
    %c15_i32_42 = arith.constant 15 : i32
    %97 = vector.broadcast %c15_i32_42 : i32 to vector<2x16x256xi32>
    %98 = arith.cmpi slt, %85, %97 : vector<2x16x256xi32>
    %cst_43 = arith.constant 0.000000e+00 : f32
    %99 = vector.broadcast %cst_43 : f32 to vector<2x16x256xf32>
    %100 = arith.select %98, %96, %99 : vector<2x16x256xi1>, vector<2x16x256xf32>
    %c14_i32_44 = arith.constant 14 : i32
    %101 = tpu.dynamic_rotate %84 by %c14_i32_44 dim 1 : vector<2x16x256xf32>, i32 -> vector<2x16x256xf32>
    %c14_i32_45 = arith.constant 14 : i32
    %102 = vector.broadcast %c14_i32_45 : i32 to vector<2x16x256xi32>
    %103 = arith.cmpi slt, %85, %102 : vector<2x16x256xi32>
    %cst_46 = arith.constant 0.000000e+00 : f32
    %104 = vector.broadcast %cst_46 : f32 to vector<2x16x256xf32>
    %105 = arith.select %103, %101, %104 : vector<2x16x256xi1>, vector<2x16x256xf32>
    %106 = arith.truncf %90 : vector<2x16x256xf32> to vector<2x16x256xbf16>
    %107 = arith.truncf %95 : vector<2x16x256xf32> to vector<2x16x256xbf16>
    %108 = arith.truncf %84 : vector<2x16x256xf32> to vector<2x16x256xbf16>
    %109 = arith.truncf %100 : vector<2x16x256xf32> to vector<2x16x256xbf16>
    %110 = arith.truncf %105 : vector<2x16x256xf32> to vector<2x16x256xbf16>
    %111 = tpu.concatenate %106, %107, %108, %109, %110 in 2 : vector<2x16x256xbf16>, vector<2x16x256xbf16>, vector<2x16x256xbf16>, vector<2x16x256xbf16>, vector<2x16x256xbf16> -> vector<2x16x1280xbf16>
    %112 = vector.shape_cast %111 : vector<2x16x1280xbf16> to vector<32x1280xbf16>
    %c0_47 = arith.constant 0 : index
    %c0_48 = arith.constant 0 : index
    %113 = vector.load %arg3[%c0_47, %c0_48] : memref<1280x128xbf16, #tpu.memory_space<vmem>>, vector<1280x128xbf16>
    %cst_49 = arith.constant dense<0.000000e+00> : vector<32x128xf32>
    %114 = tpu.matmul %112, %113, %cst_49 {dimension_numbers = #tpu.dot_dimension_numbers<[1], [0], [0], [1], [0, 0, 1, 1], [], []>} : vector<32x1280xbf16>, vector<1280x128xbf16>, vector<32x128xf32> -> vector<32x128xf32>
    %cst_50 = arith.constant dense<0.000000e+00> : vector<128xf32>
    %115 = vector.multi_reduction <add>, %114, %cst_50 [0] : vector<32x128xf32> to vector<128xf32>
    %116 = vector.shape_cast %115 : vector<128xf32> to vector<1x128xf32>
    %cst_51 = arith.constant 3.200000e+01 : f32
    %117 = vector.broadcast %cst_51 : f32 to vector<1x128xf32>
    %118 = arith.divf %116, %117 : vector<1x128xf32>
    %119 = vector.broadcast %118 : vector<1x128xf32> to vector<32x128xf32>
    %120 = arith.subf %114, %119 : vector<32x128xf32>
    %121 = arith.mulf %120, %120 : vector<32x128xf32>
    %cst_52 = arith.constant dense<0.000000e+00> : vector<128xf32>
    %122 = vector.multi_reduction <add>, %121, %cst_52 [0] : vector<32x128xf32> to vector<128xf32>
    %123 = vector.shape_cast %122 : vector<128xf32> to vector<1x128xf32>
    %cst_53 = arith.constant 3.200000e+01 : f32
    %124 = vector.broadcast %cst_53 : f32 to vector<1x128xf32>
    %125 = arith.divf %123, %124 : vector<1x128xf32>
    %cst_54 = arith.constant 9.99999974E-6 : f32
    %126 = vector.broadcast %cst_54 : f32 to vector<1x128xf32>
    %127 = arith.addf %125, %126 : vector<1x128xf32>
    %128 = math.rsqrt %127 : vector<1x128xf32>
    %129 = arith.mulf %4, %128 : vector<1x128xf32>
    %130 = vector.broadcast %129 : vector<1x128xf32> to vector<32x128xf32>
    %131 = arith.mulf %120, %130 : vector<32x128xf32>
    %132 = vector.broadcast %5 : vector<1x128xf32> to vector<32x128xf32>
    %133 = arith.addf %131, %132 : vector<32x128xf32>
    %cst_55 = arith.constant 0.000000e+00 : f32
    %134 = vector.broadcast %cst_55 : f32 to vector<32x128xf32>
    %135 = arith.maximumf %133, %134 : vector<32x128xf32>
    %136 = vector.shape_cast %135 : vector<32x128xf32> to vector<2x16x128xf32>
    %cst_56 = arith.constant dense<0xFF800000> : vector<2x128xf32>
    %137 = vector.multi_reduction <maximumf>, %136, %cst_56 [1] : vector<2x16x128xf32> to vector<2x128xf32>
    %138 = arith.truncf %137 : vector<2x128xf32> to vector<2x128xbf16>
    %c1_57 = arith.constant 1 : index
    %c0_58 = arith.constant 0 : index
    %c0_59 = arith.constant 0 : index
    %139 = vector.load %arg1[%c1_57, %c0_58, %c0_59] : memref<2x128x128xbf16, #tpu.memory_space<vmem>>, vector<1x128x128xbf16>
    %140 = vector.shape_cast %139 : vector<1x128x128xbf16> to vector<128x128xbf16>
    %cst_60 = arith.constant dense<0.000000e+00> : vector<2x128xf32>
    %141 = tpu.matmul %138, %140, %cst_60 {dimension_numbers = #tpu.dot_dimension_numbers<[1], [0], [0], [1], [0, 0, 1, 1], [], []>} : vector<2x128xbf16>, vector<128x128xbf16>, vector<2x128xf32> -> vector<2x128xf32>
    %142 = vector.broadcast %6 : vector<1x128xf32> to vector<2x128xf32>
    %143 = arith.addf %141, %142 : vector<2x128xf32>
    %c0_61 = arith.constant 0 : index
    %c0_62 = arith.constant 0 : index
    %144 = vector.load %arg5[%c0_61, %c0_62] : memref<2x128xf32, #tpu.memory_space<vmem>>, vector<2x128xf32>
    tpu.vector_store %arg5[%c0_61, %c0_62], %143 {strides = array<i32>} : memref<2x128xf32, #tpu.memory_space<vmem>>, vector<2x128xf32>,
    return
  }
}

</mosaic_0001>

<llo_original>
// kernel: basic_fcn_forward.1
$region0: #{basic_fcn_forward.1}
  #allocation0 [shape = 'u32[]', space=smem, size = 0x4, offset = 0x4, fixed_abs, tag = 'smem constant byte address 0x4 - core index']
  #allocation1 [shape = 'u32[144,128]{1,0:T(1,128)}', space=vmem, size = 0x12000, scoped, tag = 'internal scratch']
  %s0 = inlined_call_operand.vmem [shape: bf16[32,128], index: 0, kind: input, shape index: {}]
  %s1 = inlined_call_operand.vmem [shape: bf16[2,128,128], index: 1, kind: input, shape index: {}]
  %s2 = inlined_call_operand.vmem [shape: bf16[640,256], index: 2, kind: input, shape index: {}]
  %s3 = inlined_call_operand.vmem [shape: bf16[1280,128], index: 3, kind: input, shape index: {}]
  %s4 = inlined_call_operand.vmem [shape: f32[8,256], index: 4, kind: input, shape index: {}]
  %s5 = inlined_call_operand.hbm [shape: f32[2,128], index: 5, kind: output, shape index: {}]
  %s6 = sld [smem:[#allocation0]]
  $region30: #{basic_fcn_forward.1} parent=0
    _
  %s8 = ssub.s32 1, %s6
  %s9 = scalar_select 0, %s8, %s6
  $region1: #{basic_fcn_forward.1} parent=0
    #allocation2 [shape = 'u8[1024]{0}', space=vmem, size = 0x400, scoped, tag = 'output window, operand 0, single buffered']
    #allocation3 [shape = 's32[1]{0}', space=sflag, size = 0x4, scoped, tag = 'scoped memory for basic_fcn_forward.1']
    %10 = vsyncpa [#allocation3], 0
    // Predicated region
    $region2: #{basic_fcn_forward.1} parent=1 // pred_check
      _
    $region3: #{basic_fcn_forward.1} parent=1 // pred_check_branch
      %12 = sbr.rel (0) target = $region5
    $region4: #{basic_fcn_forward.1} parent=1 // pred_region
      _
    $region5: #{basic_fcn_forward.1} parent=1 // pred_fallthru
      _
    // Predicated region
    $region6: #{basic_fcn_forward.1} parent=1 // pred_check
      _
    $region7: #{basic_fcn_forward.1} parent=1 // pred_check_branch
      %14 = sbr.rel (0) target = $region9
    $region8: #{basic_fcn_forward.1} parent=1 // pred_region
      _
    $region9: #{basic_fcn_forward.1} parent=1 // pred_fallthru
      _
    // Predicated region
    $region10: #{basic_fcn_forward.1} parent=1 // pred_check
      _
    $region11: #{basic_fcn_forward.1} parent=1 // pred_check_branch
      %16 = sbr.rel (0) target = $region13
    $region12: #{basic_fcn_forward.1} parent=1 // pred_region
      _
    $region13: #{basic_fcn_forward.1} parent=1 // pred_fallthru
      _
    // Predicated region
    $region14: #{basic_fcn_forward.1} parent=1 // pred_check
      _
    $region15: #{basic_fcn_forward.1} parent=1 // pred_check_branch
      %18 = sbr.rel (0) target = $region17
    $region16: #{basic_fcn_forward.1} parent=1 // pred_region
      _
    $region17: #{basic_fcn_forward.1} parent=1 // pred_fallthru
      _
    // Predicated region
    $region18: #{basic_fcn_forward.1} parent=1 // pred_check
      _
    $region19: #{basic_fcn_forward.1} parent=1 // pred_check_branch
      %20 = sbr.rel (0) target = $region21
    $region20: #{basic_fcn_forward.1} parent=1 // pred_region
      _
    $region21: #{basic_fcn_forward.1} parent=1 // pred_fallthru
      _
    %v22 = vld [vmem:[%s4] ss:$0 sm:$0xff]
    %v23 = vld [vmem:[%s4 + $0x1] ss:$0 sm:$0xff]
    %s24 = scalar_lea.vmem %s4, 2
    %v25 = vld [vmem:[%s24] ss:$8 sm:$0x3]
    %s26 = scalar_lea.vmem %s4, 3
    %v27 = vld [vmem:[%s26] ss:$8 sm:$0x3]
    %v28 = vld [vmem:[%s4 + $0x4] ss:$0 sm:$0xff]
    %v29 = vld [vmem:[%s4 + $0x5] ss:$0 sm:$0xff]
    %v30 = vld [vmem:[%s4 + $0x6] ss:$0 sm:$0xff]
    %v31 = vld [vmem:[%s0] sm:$0xf]
    %v32 = vld [vmem:[%s0 + $0x4] sm:$0xf]
    %v33 = vld [vmem:[%s0 + $0x8] sm:$0xf]
    %v34 = vld [vmem:[%s0 + $0xc] sm:$0xf]
    %v35 = vld [vmem:[%s1] sm:$0xf]
    %v36 = vld [vmem:[%s1 + $0x4] sm:$0xf]
    %v37 = vld [vmem:[%s1 + $0x8] sm:$0xf]
    %v38 = vld [vmem:[%s1 + $0xc] sm:$0xf]
    %v39 = vld [vmem:[%s1 + $0x10] sm:$0xf]
    %v40 = vld [vmem:[%s1 + $0x14] sm:$0xf]
    %v41 = vld [vmem:[%s1 + $0x18] sm:$0xf]
    %v42 = vld [vmem:[%s1 + $0x1c] sm:$0xf]
    %v43 = vld [vmem:[%s1 + $0x20] sm:$0xf]
    %v44 = vld [vmem:[%s1 + $0x24] sm:$0xf]
    %v45 = vld [vmem:[%s1 + $0x28] sm:$0xf]
    %v46 = vld [vmem:[%s1 + $0x2c] sm:$0xf]
    %v47 = vld [vmem:[%s1 + $0x30] sm:$0xf]
    %v48 = vld [vmem:[%s1 + $0x34] sm:$0xf]
    %v49 = vld [vmem:[%s1 + $0x38] sm:$0xf]
    %v50 = vld [vmem:[%s1 + $0x3c] sm:$0xf]
    %v55 = vunpack.c.l.b16 %v31
    %v56 = vunpack.c.l.b16 %v32
    %v57 = vunpack.c.l.b16 %v33
    %v58 = vunpack.c.l.b16 %v34
    %v59 = vpack.c.b16 %v56, %v55
    %v60 = vpack.c.b16 %v58, %v57
    %v79 = vunpack.c.l.b16 %v35
    %v80 = vunpack.c.l.b16 %v36
    %v81 = vunpack.c.l.b16 %v37
    %v82 = vunpack.c.l.b16 %v38
    %v83 = vunpack.c.l.b16 %v39
    %v84 = vunpack.c.l.b16 %v40
    %v85 = vunpack.c.l.b16 %v41
    %v86 = vunpack.c.l.b16 %v42
    %v87 = vunpack.c.l.b16 %v43
    %v88 = vunpack.c.l.b16 %v44
    %v89 = vunpack.c.l.b16 %v45
    %v90 = vunpack.c.l.b16 %v46
    %v91 = vunpack.c.l.b16 %v47
    %v92 = vunpack.c.l.b16 %v48
    %v93 = vunpack.c.l.b16 %v49
    %v94 = vunpack.c.l.b16 %v50
    %v95 = vpack.c.b16 %v80, %v79
    %v96 = vpack.c.b16 %v82, %v81
    %v97 = vpack.c.b16 %v84, %v83
    %v98 = vpack.c.b16 %v86, %v85
    %v99 = vpack.c.b16 %v88, %v87
    %v100 = vpack.c.b16 %v90, %v89
    %v101 = vpack.c.b16 %v92, %v91
    %v102 = vpack.c.b16 %v94, %v93
    %111 = vmatprep.subr.bf16.mxu0 0
    %112 = vmatpush1.bf16.msra.mxu0 %v95
    %113 = vmatprep.subr.bf16.mxu0 0
    %114 = vmatpush1.bf16.msra.mxu0 %v96
    %115 = vmatprep.subr.bf16.mxu0 0
    %116 = vmatpush1.bf16.msra.mxu0 %v97
    %117 = vmatprep.subr.bf16.mxu0 0
    %118 = vmatpush1.bf16.msra.mxu0 %v98
    %119 = vmatprep.subr.bf16.mxu0 0
    %120 = vmatpush1.bf16.msra.mxu0 %v99
    %121 = vmatprep.subr.bf16.mxu0 0
    %122 = vmatpush1.bf16.msra.mxu0 %v100
    %123 = vmatprep.subr.bf16.mxu0 0
    %124 = vmatpush1.bf16.msra.mxu0 %v101
    %125 = vmatprep.subr.bf16.mxu0 0
    %126 = vmatpush1.bf16.msra.mxu0 %v102
    %127 = vmatprep.subr.bf16.mxu0 0
    %128 = vmatpush1.bf16.msra.mxu0 0
    %129 = vmatprep.subr.bf16.mxu0 0
    %130 = vmatpush1.bf16.msra.mxu0 0
    %131 = vmatprep.subr.bf16.mxu0 0
    %132 = vmatpush1.bf16.msra.mxu0 0
    %133 = vmatprep.subr.bf16.mxu0 0
    %134 = vmatpush1.bf16.msra.mxu0 0
    %135 = vmatprep.subr.bf16.mxu0 0
    %136 = vmatpush1.bf16.msra.mxu0 0
    %137 = vmatprep.subr.bf16.mxu0 0
    %138 = vmatpush1.bf16.msra.mxu0 0
    %139 = vmatprep.subr.bf16.mxu0 0
    %140 = vmatpush1.bf16.msra.mxu0 0
    %141 = vmatprep.subr.bf16.mxu0 0
    %142 = vmatpush1.bf16.msra.mxu0 0
    %143 = vmatprep.mubr.bf16.mxu0 0
    %144 = vmatmul.mubr.bf16.gmra.mrb[0].mxu0 %v59
    %v145 = vpop.f32.mrb[0].mxu0
    %v146 = vadd.f32 0.0, %v145
    %v147 = vpop.f32.mrb[0].mxu0
    %v148 = vpop.f32.mrb[0].mxu0
    %v149 = vadd.f32 0.0, %v148
    %v150 = vpop.f32.mrb[0].mxu0
    %151 = vmatprep.mubr.bf16.mxu0 0
    %152 = vmatmul.mubr.bf16.gmra.mrb[0].mxu0 %v60
    %v153 = vpop.f32.mrb[0].mxu0
    %v154 = vadd.f32 0.0, %v153
    %v155 = vpop.f32.mrb[0].mxu0
    %v156 = vpop.f32.mrb[0].mxu0
    %v157 = vadd.f32 0.0, %v156
    %v158 = vpop.f32.mrb[0].mxu0
    %159 = vdwg.mxu0
    %v160 = vadd.f32 %v146, %v149
    %v161 = vadd.f32 %v160, %v154
    %v162 = vadd.f32 %v161, %v157
    %v163 = vrot.slane %v162, 4
    %v164 = vadd.f32 %v162, %v163
    %v165 = vrot.slane %v164, 2
    %v166 = vadd.f32 %v164, %v165
    %v167 = vrot.slane %v166, 1
    %v168 = vadd.f32 %v166, %v167
    %v169 = vrcp.pop 32.0
    %v170 = vmul.f32 %v168, %v169
    %v171 = vsub.f32 %v146, %v170
    %v172 = vsub.f32 %v149, %v170
    %v173 = vsub.f32 %v154, %v170
    %v174 = vsub.f32 %v157, %v170
    %v175 = vmul.f32 %v171, %v171
    %v176 = vmul.f32 %v172, %v172
    %v177 = vmul.f32 %v173, %v173
    %v178 = vmul.f32 %v174, %v174
    %v179 = vadd.f32 %v175, %v176
    %v180 = vadd.f32 %v179, %v177
    %v181 = vadd.f32 %v180, %v178
    %v182 = vrot.slane %v181, 4
    %v183 = vadd.f32 %v181, %v182
    %v184 = vrot.slane %v183, 2
    %v185 = vadd.f32 %v183, %v184
    %v186 = vrot.slane %v185, 1
    %v187 = vadd.f32 %v185, %v186
    %v188 = vmul.f32 %v187, %v169
    %v189 = vadd.f32 %v188, 1e-05
    %v190 = vrsqrt.pop %v189
    %v191 = vmul.f32 %v22, %v190
    %v192 = vmul.f32 %v171, %v191
    %v193 = vmul.f32 %v172, %v191
    %v194 = vmul.f32 %v173, %v191
    %v195 = vmul.f32 %v174, %v191
    %v196 = vadd.f32 %v192, %v23
    %v197 = vadd.f32 %v193, %v23
    %v198 = vadd.f32 %v194, %v23
    %v199 = vadd.f32 %v195, %v23
    %v200 = vmax.f32 %v196, 0.0
    %v201 = vmax.f32 %v197, 0.0
    %v202 = vmax.f32 %v198, 0.0
    %v203 = vmax.f32 %v199, 0.0
    %v204 = vlaneseq
    %v205 = vshrl.u32 %v204, 7
    %v206 = vadd.s32 %v205, 8
    %v207 = vrot.slane %v200, 6
    %v208 = vrot.slane %v202, 6
    %v209 = vrot.slane %v201, 6
    %v210 = vrot.slane %v203, 6
    %vm211 = vcmp.lt.s32.totalorder %v205, 2
    %v212 = vsel %vm211, %v207, %v209
    %v213 = vsel %vm211, %v208, %v210
    %v214 = vsel %vm211, %v209, %v207
    %v215 = vsel %vm211, %v210, %v208
    %vm216 = vcmp.ge.s32.totalorder %v205, 2
    %vm217 = vcmp.ge.s32.totalorder %v206, 2
    %v218 = vsel %vm216, %v214, 0.0
    %v219 = vsel %vm217, %v212, 0.0
    %v220 = vsel %vm216, %v215, 0.0
    %v221 = vsel %vm217, %v213, 0.0
    %v222 = vrot.slane %v200, 7
    %v223 = vrot.slane %v202, 7
    %v224 = vrot.slane %v201, 7
    %v225 = vrot.slane %v203, 7
    %vm226 = vcmp.lt.s32.totalorder %v205, 1
    %v227 = vsel %vm226, %v222, %v224
    %v228 = vsel %vm226, %v223, %v225
    %v229 = vsel %vm226, %v224, %v222
    %v230 = vsel %vm226, %v225, %v223
    %vm231 = vcmp.ge.s32.totalorder %v205, 1
    %vm232 = vcmp.ge.s32.totalorder %v206, 1
    %v233 = vsel %vm231, %v229, 0.0
    %v234 = vsel %vm232, %v227, 0.0
    %v235 = vsel %vm231, %v230, 0.0
    %v236 = vsel %vm232, %v228, 0.0
    %v237 = vrot.slane %v200, 1
    %v238 = vrot.slane %v202, 1
    %v239 = vrot.slane %v201, 1
    %v240 = vrot.slane %v203, 1
    %vm241 = vcmp.lt.s32.totalorder %v205, 7
    %v242 = vsel %vm241, %v237, %v239
    %v243 = vsel %vm241, %v238, %v240
    %v244 = vsel %vm241, %v239, %v237
    %v245 = vsel %vm241, %v240, %v238
    %vm246 = vcmp.lt.s32.totalorder %v205, 15
    %vm247 = vcmp.lt.s32.totalorder %v206, 15
    %v248 = vsel %vm246, %v242, 0.0
    %v249 = vsel %vm247, %v244, 0.0
    %v250 = vsel %vm246, %v243, 0.0
    %v251 = vsel %vm247, %v245, 0.0
    %v252 = vrot.slane %v200, 2
    %v253 = vrot.slane %v202, 2
    %v254 = vrot.slane %v201, 2
    %v255 = vrot.slane %v203, 2
    %vm256 = vcmp.lt.s32.totalorder %v205, 6
    %v257 = vsel %vm256, %v252, %v254
    %v258 = vsel %vm256, %v253, %v255
    %v259 = vsel %vm256, %v254, %v252
    %v260 = vsel %vm256, %v255, %v253
    %vm261 = vcmp.lt.s32.totalorder %v205, 14
    %vm262 = vcmp.lt.s32.totalorder %v206, 14
    %v263 = vsel %vm261, %v257, 0.0
    %v264 = vsel %vm262, %v259, 0.0
    %v265 = vsel %vm261, %v258, 0.0
    %v266 = vsel %vm262, %v260, 0.0
    %v267 = vpack.c.bf16 %v219, %v218
    %v268 = vpack.c.bf16 %v221, %v220
    %v269 = vpack.c.bf16 %v234, %v233
    %v270 = vpack.c.bf16 %v236, %v235
    %v271 = vpack.c.bf16 %v201, %v200
    %v272 = vpack.c.bf16 %v203, %v202
    %v273 = vpack.c.bf16 %v249, %v248
    %v274 = vpack.c.bf16 %v251, %v250
    %v275 = vpack.c.bf16 %v264, %v263
    %v276 = vpack.c.bf16 %v266, %v265
    %v277 = vld [vmem:[%s2] sm:$0xff]
    %v278 = vld [vmem:[%s2 + $0x8] sm:$0xff]
    %v279 = vld [vmem:[%s2 + $0x10] sm:$0xff]
    %v280 = vld [vmem:[%s2 + $0x18] sm:$0xff]
    %v281 = vld [vmem:[%s2 + $0x20] sm:$0xff]
    %v282 = vld [vmem:[%s2 + $0x28] sm:$0xff]
    %v283 = vld [vmem:[%s2 + $0x30] sm:$0xff]
    %v284 = vld [vmem:[%s2 + $0x38] sm:$0xff]
    %v285 = vld [vmem:[%s2 + $0x40] sm:$0xff]
    %v286 = vld [vmem:[%s2 + $0x48] sm:$0xff]
    %v287 = vld [vmem:[%s2 + $0x50] sm:$0xff]
    %v288 = vld [vmem:[%s2 + $0x58] sm:$0xff]
    %v289 = vld [vmem:[%s2 + $0x60] sm:$0xff]
    %v290 = vld [vmem:[%s2 + $0x68] sm:$0xff]
    %v291 = vld [vmem:[%s2 + $0x70] sm:$0xff]
    %v292 = vld [vmem:[%s2 + $0x78] sm:$0xff]
    %v293 = vld [vmem:[%s2 + $0x80] sm:$0xff]
    %v294 = vld [vmem:[%s2 + $0x88] sm:$0xff]
    %v295 = vld [vmem:[%s2 + $0x90] sm:$0xff]
    %v296 = vld [vmem:[%s2 + $0x98] sm:$0xff]
    %v297 = vld [vmem:[%s2 + $0xa0] sm:$0xff]
    %v298 = vld [vmem:[%s2 + $0xa8] sm:$0xff]
    %v299 = vld [vmem:[%s2 + $0xb0] sm:$0xff]
    %v300 = vld [vmem:[%s2 + $0xb8] sm:$0xff]
    %v301 = vld [vmem:[%s2 + $0xc0] sm:$0xff]
    %v302 = vld [vmem:[%s2 + $0xc8] sm:$0xff]
    %v303 = vld [vmem:[%s2 + $0xd0] sm:$0xff]
    %v304 = vld [vmem:[%s2 + $0xd8] sm:$0xff]
    %v305 = vld [vmem:[%s2 + $0xe0] sm:$0xff]
    %v306 = vld [vmem:[%s2 + $0xe8] sm:$0xff]
    %v307 = vld [vmem:[%s2 + $0xf0] sm:$0xff]
    %v308 = vld [vmem:[%s2 + $0xf8] sm:$0xff]
    %v309 = vld [vmem:[%s2 + $0x100] sm:$0xff]
    %v310 = vld [vmem:[%s2 + $0x108] sm:$0xff]
    %v311 = vld [vmem:[%s2 + $0x110] sm:$0xff]
    %v312 = vld [vmem:[%s2 + $0x118] sm:$0xff]
    %v313 = vld [vmem:[%s2 + $0x120] sm:$0xff]
    %v314 = vld [vmem:[%s2 + $0x128] sm:$0xff]
    %v315 = vld [vmem:[%s2 + $0x130] sm:$0xff]
    %v316 = vld [vmem:[%s2 + $0x138] sm:$0xff]
    %v317 = vld [vmem:[%s2 + $0x140] sm:$0xff]
    %v318 = vld [vmem:[%s2 + $0x148] sm:$0xff]
    %v319 = vld [vmem:[%s2 + $0x150] sm:$0xff]
    %v320 = vld [vmem:[%s2 + $0x158] sm:$0xff]
    %v321 = vld [vmem:[%s2 + $0x160] sm:$0xff]
    %v322 = vld [vmem:[%s2 + $0x168] sm:$0xff]
    %v323 = vld [vmem:[%s2 + $0x170] sm:$0xff]
    %v324 = vld [vmem:[%s2 + $0x178] sm:$0xff]
    %v325 = vld [vmem:[%s2 + $0x180] sm:$0xff]
    %v326 = vld [vmem:[%s2 + $0x188] sm:$0xff]
    %v327 = vld [vmem:[%s2 + $0x190] sm:$0xff]
    %v328 = vld [vmem:[%s2 + $0x198] sm:$0xff]
    %v329 = vld [vmem:[%s2 + $0x1a0] sm:$0xff]
    %v330 = vld [vmem:[%s2 + $0x1a8] sm:$0xff]
    %v331 = vld [vmem:[%s2 + $0x1b0] sm:$0xff]
    %v332 = vld [vmem:[%s2 + $0x1b8] sm:$0xff]
    %v333 = vld [vmem:[%s2 + $0x1c0] sm:$0xff]
    %v334 = vld [vmem:[%s2 + $0x1c8] sm:$0xff]
    %v335 = vld [vmem:[%s2 + $0x1d0] sm:$0xff]
    %v336 = vld [vmem:[%s2 + $0x1d8] sm:$0xff]
    %v337 = vld [vmem:[%s2 + $0x1e0] sm:$0xff]
    %v338 = vld [vmem:[%s2 + $0x1e8] sm:$0xff]
    %v339 = vld [vmem:[%s2 + $0x1f0] sm:$0xff]
    %v340 = vld [vmem:[%s2 + $0x1f8] sm:$0xff]
    %v341 = vld [vmem:[%s2 + $0x200] sm:$0xff]
    %v342 = vld [vmem:[%s2 + $0x208] sm:$0xff]
    %v343 = vld [vmem:[%s2 + $0x210] sm:$0xff]
    %v344 = vld [vmem:[%s2 + $0x218] sm:$0xff]
    %v345 = vld [vmem:[%s2 + $0x220] sm:$0xff]
    %v346 = vld [vmem:[%s2 + $0x228] sm:$0xff]
    %v347 = vld [vmem:[%s2 + $0x230] sm:$0xff]
    %v348 = vld [vmem:[%s2 + $0x238] sm:$0xff]
    %v349 = vld [vmem:[%s2 + $0x240] sm:$0xff]
    %v350 = vld [vmem:[%s2 + $0x248] sm:$0xff]
    %v351 = vld [vmem:[%s2 + $0x250] sm:$0xff]
    %v352 = vld [vmem:[%s2 + $0x258] sm:$0xff]
    %v353 = vld [vmem:[%s2 + $0x260] sm:$0xff]
    %v354 = vld [vmem:[%s2 + $0x268] sm:$0xff]
    %v355 = vld [vmem:[%s2 + $0x270] sm:$0xff]
    %v356 = vld [vmem:[%s2 + $0x278] sm:$0xff]
    %v437 = vunpack.c.l.b16 %v277
    %v438 = vunpack.c.h.b16 %v277
    %v439 = vunpack.c.l.b16 %v278
    %v440 = vunpack.c.h.b16 %v278
    %v441 = vunpack.c.l.b16 %v279
    %v442 = vunpack.c.h.b16 %v279
    %v443 = vunpack.c.l.b16 %v280
    %v444 = vunpack.c.h.b16 %v280
    %v445 = vunpack.c.l.b16 %v281
    %v446 = vunpack.c.h.b16 %v281
    %v447 = vunpack.c.l.b16 %v282
    %v448 = vunpack.c.h.b16 %v282
    %v449 = vunpack.c.l.b16 %v283
    %v450 = vunpack.c.h.b16 %v283
    %v451 = vunpack.c.l.b16 %v284
    %v452 = vunpack.c.h.b16 %v284
    %v453 = vunpack.c.l.b16 %v285
    %v454 = vunpack.c.h.b16 %v285
    %v455 = vunpack.c.l.b16 %v286
    %v456 = vunpack.c.h.b16 %v286
    %v457 = vunpack.c.l.b16 %v287
    %v458 = vunpack.c.h.b16 %v287
    %v459 = vunpack.c.l.b16 %v288
    %v460 = vunpack.c.h.b16 %v288
    %v461 = vunpack.c.l.b16 %v289
    %v462 = vunpack.c.h.b16 %v289
    %v463 = vunpack.c.l.b16 %v290
    %v464 = vunpack.c.h.b16 %v290
    %v465 = vunpack.c.l.b16 %v291
    %v466 = vunpack.c.h.b16 %v291
    %v467 = vunpack.c.l.b16 %v292
    %v468 = vunpack.c.h.b16 %v292
    %v469 = vunpack.c.l.b16 %v293
    %v470 = vunpack.c.h.b16 %v293
    %v471 = vunpack.c.l.b16 %v294
    %v472 = vunpack.c.h.b16 %v294
    %v473 = vunpack.c.l.b16 %v295
    %v474 = vunpack.c.h.b16 %v295
    %v475 = vunpack.c.l.b16 %v296
    %v476 = vunpack.c.h.b16 %v296
    %v477 = vunpack.c.l.b16 %v297
    %v478 = vunpack.c.h.b16 %v297
    %v479 = vunpack.c.l.b16 %v298
    %v480 = vunpack.c.h.b16 %v298
    %v481 = vunpack.c.l.b16 %v299
    %v482 = vunpack.c.h.b16 %v299
    %v483 = vunpack.c.l.b16 %v300
    %v484 = vunpack.c.h.b16 %v300
    %v485 = vunpack.c.l.b16 %v301
    %v486 = vunpack.c.h.b16 %v301
    %v487 = vunpack.c.l.b16 %v302
    %v488 = vunpack.c.h.b16 %v302
    %v489 = vunpack.c.l.b16 %v303
    %v490 = vunpack.c.h.b16 %v303
    %v491 = vunpack.c.l.b16 %v304
    %v492 = vunpack.c.h.b16 %v304
    %v493 = vunpack.c.l.b16 %v305
    %v494 = vunpack.c.h.b16 %v305
    %v495 = vunpack.c.l.b16 %v306
    %v496 = vunpack.c.h.b16 %v306
    %v497 = vunpack.c.l.b16 %v307
    %v498 = vunpack.c.h.b16 %v307
    %v499 = vunpack.c.l.b16 %v308
    %v500 = vunpack.c.h.b16 %v308
    %v501 = vunpack.c.l.b16 %v309
    %v502 = vunpack.c.h.b16 %v309
    %v503 = vunpack.c.l.b16 %v310
    %v504 = vunpack.c.h.b16 %v310
    %v505 = vunpack.c.l.b16 %v311
    %v506 = vunpack.c.h.b16 %v311
    %v507 = vunpack.c.l.b16 %v312
    %v508 = vunpack.c.h.b16 %v312
    %v509 = vunpack.c.l.b16 %v313
    %v510 = vunpack.c.h.b16 %v313
    %v511 = vunpack.c.l.b16 %v314
    %v512 = vunpack.c.h.b16 %v314
    %v513 = vunpack.c.l.b16 %v315
    %v514 = vunpack.c.h.b16 %v315
    %v515 = vunpack.c.l.b16 %v316
    %v516 = vunpack.c.h.b16 %v316
    %v517 = vunpack.c.l.b16 %v317
    %v518 = vunpack.c.h.b16 %v317
    %v519 = vunpack.c.l.b16 %v318
    %v520 = vunpack.c.h.b16 %v318
    %v521 = vunpack.c.l.b16 %v319
    %v522 = vunpack.c.h.b16 %v319
    %v523 = vunpack.c.l.b16 %v320
    %v524 = vunpack.c.h.b16 %v320
    %v525 = vunpack.c.l.b16 %v321
    %v526 = vunpack.c.h.b16 %v321
    %v527 = vunpack.c.l.b16 %v322
    %v528 = vunpack.c.h.b16 %v322
    %v529 = vunpack.c.l.b16 %v323
    %v530 = vunpack.c.h.b16 %v323
    %v531 = vunpack.c.l.b16 %v324
    %v532 = vunpack.c.h.b16 %v324
    %v533 = vunpack.c.l.b16 %v325
    %v534 = vunpack.c.h.b16 %v325
    %v535 = vunpack.c.l.b16 %v326
    %v536 = vunpack.c.h.b16 %v326
    %v537 = vunpack.c.l.b16 %v327
    %v538 = vunpack.c.h.b16 %v327
    %v539 = vunpack.c.l.b16 %v328
    %v540 = vunpack.c.h.b16 %v328
    %v541 = vunpack.c.l.b16 %v329
    %v542 = vunpack.c.h.b16 %v329
    %v543 = vunpack.c.l.b16 %v330
    %v544 = vunpack.c.h.b16 %v330
    %v545 = vunpack.c.l.b16 %v331
    %v546 = vunpack.c.h.b16 %v331
    %v547 = vunpack.c.l.b16 %v332
    %v548 = vunpack.c.h.b16 %v332
    %v549 = vunpack.c.l.b16 %v333
    %v550 = vunpack.c.h.b16 %v333
    %v551 = vunpack.c.l.b16 %v334
    %v552 = vunpack.c.h.b16 %v334
    %v553 = vunpack.c.l.b16 %v335
    %v554 = vunpack.c.h.b16 %v335
    %v555 = vunpack.c.l.b16 %v336
    %v556 = vunpack.c.h.b16 %v336
    %v557 = vunpack.c.l.b16 %v337
    %v558 = vunpack.c.h.b16 %v337
    %v559 = vunpack.c.l.b16 %v338
    %v560 = vunpack.c.h.b16 %v338
    %v561 = vunpack.c.l.b16 %v339
    %v562 = vunpack.c.h.b16 %v339
    %v563 = vunpack.c.l.b16 %v340
    %v564 = vunpack.c.h.b16 %v340
    %v565 = vunpack.c.l.b16 %v341
    %v566 = vunpack.c.h.b16 %v341
    %v567 = vunpack.c.l.b16 %v342
    %v568 = vunpack.c.h.b16 %v342
    %v569 = vunpack.c.l.b16 %v343
    %v570 = vunpack.c.h.b16 %v343
    %v571 = vunpack.c.l.b16 %v344
    %v572 = vunpack.c.h.b16 %v344
    %v573 = vunpack.c.l.b16 %v345
    %v574 = vunpack.c.h.b16 %v345
    %v575 = vunpack.c.l.b16 %v346
    %v576 = vunpack.c.h.b16 %v346
    %v577 = vunpack.c.l.b16 %v347
    %v578 = vunpack.c.h.b16 %v347
    %v579 = vunpack.c.l.b16 %v348
    %v580 = vunpack.c.h.b16 %v348
    %v581 = vunpack.c.l.b16 %v349
    %v582 = vunpack.c.h.b16 %v349
    %v583 = vunpack.c.l.b16 %v350
    %v584 = vunpack.c.h.b16 %v350
    %v585 = vunpack.c.l.b16 %v351
    %v586 = vunpack.c.h.b16 %v351
    %v587 = vunpack.c.l.b16 %v352
    %v588 = vunpack.c.h.b16 %v352
    %v589 = vunpack.c.l.b16 %v353
    %v590 = vunpack.c.h.b16 %v353
    %v591 = vunpack.c.l.b16 %v354
    %v592 = vunpack.c.h.b16 %v354
    %v593 = vunpack.c.l.b16 %v355
    %v594 = vunpack.c.h.b16 %v355
    %v595 = vunpack.c.l.b16 %v356
    %v596 = vunpack.c.h.b16 %v356
    %v597 = vpack.c.b16 %v439, %v437
    %v598 = vpack.c.b16 %v440, %v438
    %v599 = vpack.c.b16 %v443, %v441
    %v600 = vpack.c.b16 %v444, %v442
    %v601 = vpack.c.b16 %v447, %v445
    %v602 = vpack.c.b16 %v448, %v446
    %v603 = vpack.c.b16 %v451, %v449
    %v604 = vpack.c.b16 %v452, %v450
    %v605 = vpack.c.b16 %v455, %v453
    %v606 = vpack.c.b16 %v456, %v454
    %v607 = vpack.c.b16 %v459, %v457
    %v608 = vpack.c.b16 %v460, %v458
    %v609 = vpack.c.b16 %v463, %v461
    %v610 = vpack.c.b16 %v464, %v462
    %v611 = vpack.c.b16 %v467, %v465
    %v612 = vpack.c.b16 %v468, %v466
    %v613 = vpack.c.b16 %v471, %v469
    %v614 = vpack.c.b16 %v472, %v470
    %v615 = vpack.c.b16 %v475, %v473
    %v616 = vpack.c.b16 %v476, %v474
    %v617 = vpack.c.b16 %v479, %v477
    %v618 = vpack.c.b16 %v480, %v478
    %v619 = vpack.c.b16 %v483, %v481
    %v620 = vpack.c.b16 %v484, %v482
    %v621 = vpack.c.b16 %v487, %v485
    %v622 = vpack.c.b16 %v488, %v486
    %v623 = vpack.c.b16 %v491, %v489
    %v624 = vpack.c.b16 %v492, %v490
    %v625 = vpack.c.b16 %v495, %v493
    %v626 = vpack.c.b16 %v496, %v494
    %v627 = vpack.c.b16 %v499, %v497
    %v628 = vpack.c.b16 %v500, %v498
    %v629 = vpack.c.b16 %v503, %v501
    %v630 = vpack.c.b16 %v504, %v502
    %v631 = vpack.c.b16 %v507, %v505
    %v632 = vpack.c.b16 %v508, %v506
    %v633 = vpack.c.b16 %v511, %v509
    %v634 = vpack.c.b16 %v512, %v510
    %v635 = vpack.c.b16 %v515, %v513
    %v636 = vpack.c.b16 %v516, %v514
    %v637 = vpack.c.b16 %v519, %v517
    %v638 = vpack.c.b16 %v520, %v518
    %v639 = vpack.c.b16 %v523, %v521
    %v640 = vpack.c.b16 %v524, %v522
    %v641 = vpack.c.b16 %v527, %v525
    %v642 = vpack.c.b16 %v528, %v526
    %v643 = vpack.c.b16 %v531, %v529
    %v644 = vpack.c.b16 %v532, %v530
    %v645 = vpack.c.b16 %v535, %v533
    %v646 = vpack.c.b16 %v536, %v534
    %v647 = vpack.c.b16 %v539, %v537
    %v648 = vpack.c.b16 %v540, %v538
    %v649 = vpack.c.b16 %v543, %v541
    %v650 = vpack.c.b16 %v544, %v542
    %v651 = vpack.c.b16 %v547, %v545
    %v652 = vpack.c.b16 %v548, %v546
    %v653 = vpack.c.b16 %v551, %v549
    %v654 = vpack.c.b16 %v552, %v550
    %v655 = vpack.c.b16 %v555, %v553
    %v656 = vpack.c.b16 %v556, %v554
    %v657 = vpack.c.b16 %v559, %v557
    %v658 = vpack.c.b16 %v560, %v558
    %v659 = vpack.c.b16 %v563, %v561
    %v660 = vpack.c.b16 %v564, %v562
    %v661 = vpack.c.b16 %v567, %v565
    %v662 = vpack.c.b16 %v568, %v566
    %v663 = vpack.c.b16 %v571, %v569
    %v664 = vpack.c.b16 %v572, %v570
    %v665 = vpack.c.b16 %v575, %v573
    %v666 = vpack.c.b16 %v576, %v574
    %v667 = vpack.c.b16 %v579, %v577
    %v668 = vpack.c.b16 %v580, %v578
    %v669 = vpack.c.b16 %v583, %v581
    %v670 = vpack.c.b16 %v584, %v582
    %v671 = vpack.c.b16 %v587, %v585
    %v672 = vpack.c.b16 %v588, %v586
    %v673 = vpack.c.b16 %v591, %v589
    %v674 = vpack.c.b16 %v592, %v590
    %v675 = vpack.c.b16 %v595, %v593
    %v676 = vpack.c.b16 %v596, %v594
    %757 = vmatprep.subr.bf16.mxu0 %v598
    %758 = vmatpush1.bf16.msra.mxu0 %v597
    %759 = vmatprep.subr.bf16.mxu0 %v600
    %760 = vmatpush1.bf16.msra.mxu0 %v599
    %761 = vmatprep.subr.bf16.mxu0 %v602
    %762 = vmatpush1.bf16.msra.mxu0 %v601
    %763 = vmatprep.subr.bf16.mxu0 %v604
    %764 = vmatpush1.bf16.msra.mxu0 %v603
    %765 = vmatprep.subr.bf16.mxu0 %v606
    %766 = vmatpush1.bf16.msra.mxu0 %v605
    %767 = vmatprep.subr.bf16.mxu0 %v608
    %768 = vmatpush1.bf16.msra.mxu0 %v607
    %769 = vmatprep.subr.bf16.mxu0 %v610
    %770 = vmatpush1.bf16.msra.mxu0 %v609
    %771 = vmatprep.subr.bf16.mxu0 %v612
    %772 = vmatpush1.bf16.msra.mxu0 %v611
    %773 = vmatprep.subr.bf16.mxu0 %v614
    %774 = vmatpush1.bf16.msra.mxu0 %v613
    %775 = vmatprep.subr.bf16.mxu0 %v616
    %776 = vmatpush1.bf16.msra.mxu0 %v615
    %777 = vmatprep.subr.bf16.mxu0 %v618
    %778 = vmatpush1.bf16.msra.mxu0 %v617
    %779 = vmatprep.subr.bf16.mxu0 %v620
    %780 = vmatpush1.bf16.msra.mxu0 %v619
    %781 = vmatprep.subr.bf16.mxu0 %v622
    %782 = vmatpush1.bf16.msra.mxu0 %v621
    %783 = vmatprep.subr.bf16.mxu0 %v624
    %784 = vmatpush1.bf16.msra.mxu0 %v623
    %785 = vmatprep.subr.bf16.mxu0 %v626
    %786 = vmatpush1.bf16.msra.mxu0 %v625
    %787 = vmatprep.subr.bf16.mxu0 %v628
    %788 = vmatpush1.bf16.msra.mxu0 %v627
    %789 = vmatprep.mubr.bf16.mxu0 %v269
    %790 = vmatmul.mubr.bf16.gmra.mrb[0].mxu0 %v267
    %v791 = vpop.f32.mrb[0].mxu0
    %v792 = vadd.f32 0.0, %v791
    %v793 = vpop.f32.mrb[0].mxu0
    %v794 = vadd.f32 0.0, %v793
    %v795 = vpop.f32.mrb[0].mxu0
    %v796 = vadd.f32 0.0, %v795
    %v797 = vpop.f32.mrb[0].mxu0
    %v798 = vadd.f32 0.0, %v797
    %799 = vmatprep.mubr.bf16.mxu0 %v270
    %800 = vmatmul.mubr.bf16.gmra.mrb[0].mxu0 %v268
    %v801 = vpop.f32.mrb[0].mxu0
    %v802 = vadd.f32 0.0, %v801
    %v803 = vpop.f32.mrb[0].mxu0
    %v804 = vadd.f32 0.0, %v803
    %v805 = vpop.f32.mrb[0].mxu0
    %v806 = vadd.f32 0.0, %v805
    %v807 = vpop.f32.mrb[0].mxu0
    %v808 = vadd.f32 0.0, %v807
    %809 = vdwg.mxu0
    %810 = vmatprep.subr.bf16.mxu0 %v630
    %811 = vmatpush1.bf16.msra.mxu0 %v629
    %812 = vmatprep.subr.bf16.mxu0 %v632
    %813 = vmatpush1.bf16.msra.mxu0 %v631
    %814 = vmatprep.subr.bf16.mxu0 %v634
    %815 = vmatpush1.bf16.msra.mxu0 %v633
    %816 = vmatprep.subr.bf16.mxu0 %v636
    %817 = vmatpush1.bf16.msra.mxu0 %v635
    %818 = vmatprep.subr.bf16.mxu0 %v638
    %819 = vmatpush1.bf16.msra.mxu0 %v637
    %820 = vmatprep.subr.bf16.mxu0 %v640
    %821 = vmatpush1.bf16.msra.mxu0 %v639
    %822 = vmatprep.subr.bf16.mxu0 %v642
    %823 = vmatpush1.bf16.msra.mxu0 %v641
    %824 = vmatprep.subr.bf16.mxu0 %v644
    %825 = vmatpush1.bf16.msra.mxu0 %v643
    %826 = vmatprep.subr.bf16.mxu0 %v646
    %827 = vmatpush1.bf16.msra.mxu0 %v645
    %828 = vmatprep.subr.bf16.mxu0 %v648
    %829 = vmatpush1.bf16.msra.mxu0 %v647
    %830 = vmatprep.subr.bf16.mxu0 %v650
    %831 = vmatpush1.bf16.msra.mxu0 %v649
    %832 = vmatprep.subr.bf16.mxu0 %v652
    %833 = vmatpush1.bf16.msra.mxu0 %v651
    %834 = vmatprep.subr.bf16.mxu0 %v654
    %835 = vmatpush1.bf16.msra.mxu0 %v653
    %836 = vmatprep.subr.bf16.mxu0 %v656
    %837 = vmatpush1.bf16.msra.mxu0 %v655
    %838 = vmatprep.subr.bf16.mxu0 %v658
    %839 = vmatpush1.bf16.msra.mxu0 %v657
    %840 = vmatprep.subr.bf16.mxu0 %v660
    %841 = vmatpush1.bf16.msra.mxu0 %v659
    %842 = vmatprep.mubr.bf16.mxu0 %v273
    %843 = vmatmul.mubr.bf16.gmra.mrb[0].mxu0 %v271
    %v844 = vpop.f32.mrb[0].mxu0
    %v845 = vadd.f32 %v792, %v844
    %v846 = vpop.f32.mrb[0].mxu0
    %v847 = vadd.f32 %v794, %v846
    %v848 = vpop.f32.mrb[0].mxu0
    %v849 = vadd.f32 %v796, %v848
    %v850 = vpop.f32.mrb[0].mxu0
    %v851 = vadd.f32 %v798, %v850
    %852 = vmatprep.mubr.bf16.mxu0 %v274
    %853 = vmatmul.mubr.bf16.gmra.mrb[0].mxu0 %v272
    %v854 = vpop.f32.mrb[0].mxu0
    %v855 = vadd.f32 %v802, %v854
    %v856 = vpop.f32.mrb[0].mxu0
    %v857 = vadd.f32 %v804, %v856
    %v858 = vpop.f32.mrb[0].mxu0
    %v859 = vadd.f32 %v806, %v858
    %v860 = vpop.f32.mrb[0].mxu0
    %v861 = vadd.f32 %v808, %v860
    %862 = vdwg.mxu0
    %863 = vmatprep.subr.bf16.mxu0 %v662
    %864 = vmatpush1.bf16.msra.mxu0 %v661
    %865 = vmatprep.subr.bf16.mxu0 %v664
    %866 = vmatpush1.bf16.msra.mxu0 %v663
    %867 = vmatprep.subr.bf16.mxu0 %v666
    %868 = vmatpush1.bf16.msra.mxu0 %v665
    %869 = vmatprep.subr.bf16.mxu0 %v668
    %870 = vmatpush1.bf16.msra.mxu0 %v667
    %871 = vmatprep.subr.bf16.mxu0 %v670
    %872 = vmatpush1.bf16.msra.mxu0 %v669
    %873 = vmatprep.subr.bf16.mxu0 %v672
    %874 = vmatpush1.bf16.msra.mxu0 %v671
    %875 = vmatprep.subr.bf16.mxu0 %v674
    %876 = vmatpush1.bf16.msra.mxu0 %v673
    %877 = vmatprep.subr.bf16.mxu0 %v676
    %878 = vmatpush1.bf16.msra.mxu0 %v675
    %879 = vmatprep.subr.bf16.mxu0 0
    %880 = vmatpush1.bf16.msra.mxu0 0
    %881 = vmatprep.subr.bf16.mxu0 0
    %882 = vmatpush1.bf16.msra.mxu0 0
    %883 = vmatprep.subr.bf16.mxu0 0
    %884 = vmatpush1.bf16.msra.mxu0 0
    %885 = vmatprep.subr.bf16.mxu0 0
    %886 = vmatpush1.bf16.msra.mxu0 0
    %887 = vmatprep.subr.bf16.mxu0 0
    %888 = vmatpush1.bf16.msra.mxu0 0
    %889 = vmatprep.subr.bf16.mxu0 0
    %890 = vmatpush1.bf16.msra.mxu0 0
    %891 = vmatprep.subr.bf16.mxu0 0
    %892 = vmatpush1.bf16.msra.mxu0 0
    %893 = vmatprep.subr.bf16.mxu0 0
    %894 = vmatpush1.bf16.msra.mxu0 0
    %895 = vmatprep.mubr.bf16.mxu0 0
    %896 = vmatmul.mubr.bf16.gmra.mrb[0].mxu0 %v275
    %v897 = vpop.f32.mrb[0].mxu0
    %v898 = vadd.f32 %v845, %v897
    %v899 = vpop.f32.mrb[0].mxu0
    %v900 = vadd.f32 %v847, %v899
    %v901 = vpop.f32.mrb[0].mxu0
    %v902 = vadd.f32 %v849, %v901
    %v903 = vpop.f32.mrb[0].mxu0
    %v904 = vadd.f32 %v851, %v903
    %905 = vmatprep.mubr.bf16.mxu0 0
    %906 = vmatmul.mubr.bf16.gmra.mrb[0].mxu0 %v276
    %v907 = vpop.f32.mrb[0].mxu0
    %v908 = vadd.f32 %v855, %v907
    %v909 = vpop.f32.mrb[0].mxu0
    %v910 = vadd.f32 %v857, %v909
    %v911 = vpop.f32.mrb[0].mxu0
    %v912 = vadd.f32 %v859, %v911
    %v913 = vpop.f32.mrb[0].mxu0
    %v914 = vadd.f32 %v861, %v913
    %915 = vdwg.mxu0
    %v916 = vadd.f32 %v898, %v902
    %v917 = vadd.f32 %v916, %v908
    %v918 = vadd.f32 %v917, %v912
    %v919 = vrot.slane %v918, 4
    %v920 = vadd.f32 %v918, %v919
    %v921 = vrot.slane %v920, 2
    %v922 = vadd.f32 %v920, %v921
    %v923 = vrot.slane %v922, 1
    %v924 = vadd.f32 %v922, %v923
    %v925 = vadd.f32 %v900, %v904
    %v926 = vadd.f32 %v925, %v910
    %v927 = vadd.f32 %v926, %v914
    %v928 = vrot.slane %v927, 4
    %v929 = vadd.f32 %v927, %v928
    %v930 = vrot.slane %v929, 2
    %v931 = vadd.f32 %v929, %v930
    %v932 = vrot.slane %v931, 1
    %v933 = vadd.f32 %v931, %v932
    %v934 = vmul.f32 %v924, %v169
    %v935 = vmul.f32 %v933, %v169
    %v936 = vsub.f32 %v898, %v934
    %v937 = vsub.f32 %v900, %v935
    %v938 = vsub.f32 %v902, %v934
    %v939 = vsub.f32 %v904, %v935
    %v940 = vsub.f32 %v908, %v934
    %v941 = vsub.f32 %v910, %v935
    %v942 = vsub.f32 %v912, %v934
    %v943 = vsub.f32 %v914, %v935
    %v944 = vmul.f32 %v936, %v936
    %v945 = vmul.f32 %v937, %v937
    %v946 = vmul.f32 %v938, %v938
    %v947 = vmul.f32 %v939, %v939
    %v948 = vmul.f32 %v940, %v940
    %v949 = vmul.f32 %v941, %v941
    %v950 = vmul.f32 %v942, %v942
    %v951 = vmul.f32 %v943, %v943
    %v952 = vadd.f32 %v944, %v946
    %v953 = vadd.f32 %v952, %v948
    %v954 = vadd.f32 %v953, %v950
    %v955 = vrot.slane %v954, 4
    %v956 = vadd.f32 %v954, %v955
    %v957 = vrot.slane %v956, 2
    %v958 = vadd.f32 %v956, %v957
    %v959 = vrot.slane %v958, 1
    %v960 = vadd.f32 %v958, %v959
    %v961 = vadd.f32 %v945, %v947
    %v962 = vadd.f32 %v961, %v949
    %v963 = vadd.f32 %v962, %v951
    %v964 = vrot.slane %v963, 4
    %v965 = vadd.f32 %v963, %v964
    %v966 = vrot.slane %v965, 2
    %v967 = vadd.f32 %v965, %v966
    %v968 = vrot.slane %v967, 1
    %v969 = vadd.f32 %v967, %v968
    %v970 = vmul.f32 %v960, %v169
    %v971 = vmul.f32 %v969, %v169
    %v972 = vadd.f32 %v970, 1e-05
    %v973 = vadd.f32 %v971, 1e-05
    %v974 = vrsqrt.pop %v972
    %v975 = vrsqrt.pop %v973
    %v978 = vcombine.low %v974, %v975
    %v980 = vunpack.c.l.s4 1966171168
    %v981 = vunpack.c.0.s8 %v980
    %v982 = vlaneseq
    %v983 = vshrl.u32 %v982, 7
    %v984 = vsub.s32 %v981, %v983
    %v985 = vrot.slane %v978, %v984
    %v987 = vunpack.c.l.s4 1966171168
    %v988 = vunpack.c.0.s8 %v987
    %v989 = vlaneseq
    %v990 = vshrl.u32 %v989, 7
    %v991 = vsub.s32 %v988, %v990
    %v992 = vrot.slane %v985, %v991
    %v994 = vmul.f32 %v25, %v992
    %v996 = vlaneseq
    %v997 = vshrl.u32 %v996, 7
    %v998 = vsub.s32 0, %v997
    %v999 = vrot.slane %v994, %v998
    %v1000 = vlaneseq
    %v1001 = vshrl.u32 %v1000, 7
    %v1002 = vsub.s32 1, %v1001
    %v1003 = vrot.slane %v994, %v1002
    %v1006 = vmul.f32 %v936, %v999
    %v1007 = vmul.f32 %v937, %v1003
    %v1008 = vmul.f32 %v938, %v999
    %v1009 = vmul.f32 %v939, %v1003
    %v1010 = vmul.f32 %v940, %v999
    %v1011 = vmul.f32 %v941, %v1003
    %v1012 = vmul.f32 %v942, %v999
    %v1013 = vmul.f32 %v943, %v1003
    %v1015 = vlaneseq
    %v1016 = vshrl.u32 %v1015, 7
    %v1017 = vsub.s32 0, %v1016
    %v1018 = vrot.slane %v27, %v1017
    %v1019 = vlaneseq
    %v1020 = vshrl.u32 %v1019, 7
    %v1021 = vsub.s32 1, %v1020
    %v1022 = vrot.slane %v27, %v1021
    %v1025 = vadd.f32 %v1006, %v1018
    %v1026 = vadd.f32 %v1007, %v1022
    %v1027 = vadd.f32 %v1008, %v1018
    %v1028 = vadd.f32 %v1009, %v1022
    %v1029 = vadd.f32 %v1010, %v1018
    %v1030 = vadd.f32 %v1011, %v1022
    %v1031 = vadd.f32 %v1012, %v1018
    %v1032 = vadd.f32 %v1013, %v1022
    %v1033 = vmax.f32 %v1025, 0.0
    %v1034 = vmax.f32 %v1026, 0.0
    %v1035 = vmax.f32 %v1027, 0.0
    %v1036 = vmax.f32 %v1028, 0.0
    %v1037 = vmax.f32 %v1029, 0.0
    %v1038 = vmax.f32 %v1030, 0.0
    %v1039 = vmax.f32 %v1031, 0.0
    %v1040 = vmax.f32 %v1032, 0.0
    %v1041 = vrot.slane %v1033, 6
    %v1042 = vrot.slane %v1034, 6
    %v1043 = vrot.slane %v1037, 6
    %v1044 = vrot.slane %v1038, 6
    %v1045 = vrot.slane %v1035, 6
    %v1046 = vrot.slane %v1036, 6
    %v1047 = vrot.slane %v1039, 6
    %v1048 = vrot.slane %v1040, 6
    %v1049 = vsel %vm211, %v1041, %v1045
    %v1050 = vsel %vm211, %v1042, %v1046
    %v1051 = vsel %vm211, %v1043, %v1047
    %v1052 = vsel %vm211, %v1044, %v1048
    %v1053 = vsel %vm211, %v1045, %v1041
    %v1054 = vsel %vm211, %v1046, %v1042
    %v1055 = vsel %vm211, %v1047, %v1043
    %v1056 = vsel %vm211, %v1048, %v1044
    %v1057 = vsel %vm216, %v1053, 0.0
    %v1058 = vsel %vm216, %v1054, 0.0
    %v1059 = vsel %vm217, %v1049, 0.0
    %v1060 = vsel %vm217, %v1050, 0.0
    %v1061 = vsel %vm216, %v1055, 0.0
    %v1062 = vsel %vm216, %v1056, 0.0
    %v1063 = vsel %vm217, %v1051, 0.0
    %v1064 = vsel %vm217, %v1052, 0.0
    %v1065 = vrot.slane %v1033, 7
    %v1066 = vrot.slane %v1034, 7
    %v1067 = vrot.slane %v1037, 7
    %v1068 = vrot.slane %v1038, 7
    %v1069 = vrot.slane %v1035, 7
    %v1070 = vrot.slane %v1036, 7
    %v1071 = vrot.slane %v1039, 7
    %v1072 = vrot.slane %v1040, 7
    %v1073 = vsel %vm226, %v1065, %v1069
    %v1074 = vsel %vm226, %v1066, %v1070
    %v1075 = vsel %vm226, %v1067, %v1071
    %v1076 = vsel %vm226, %v1068, %v1072
    %v1077 = vsel %vm226, %v1069, %v1065
    %v1078 = vsel %vm226, %v1070, %v1066
    %v1079 = vsel %vm226, %v1071, %v1067
    %v1080 = vsel %vm226, %v1072, %v1068
    %v1081 = vsel %vm231, %v1077, 0.0
    %v1082 = vsel %vm231, %v1078, 0.0
    %v1083 = vsel %vm232, %v1073, 0.0
    %v1084 = vsel %vm232, %v1074, 0.0
    %v1085 = vsel %vm231, %v1079, 0.0
    %v1086 = vsel %vm231, %v1080, 0.0
    %v1087 = vsel %vm232, %v1075, 0.0
    %v1088 = vsel %vm232, %v1076, 0.0
    %v1089 = vrot.slane %v1033, 1
    %v1090 = vrot.slane %v1034, 1
    %v1091 = vrot.slane %v1037, 1
    %v1092 = vrot.slane %v1038, 1
    %v1093 = vrot.slane %v1035, 1
    %v1094 = vrot.slane %v1036, 1
    %v1095 = vrot.slane %v1039, 1
    %v1096 = vrot.slane %v1040, 1
    %v1097 = vsel %vm241, %v1089, %v1093
    %v1098 = vsel %vm241, %v1090, %v1094
    %v1099 = vsel %vm241, %v1091, %v1095
    %v1100 = vsel %vm241, %v1092, %v1096
    %v1101 = vsel %vm241, %v1093, %v1089
    %v1102 = vsel %vm241, %v1094, %v1090
    %v1103 = vsel %vm241, %v1095, %v1091
    %v1104 = vsel %vm241, %v1096, %v1092
    %v1105 = vsel %vm246, %v1097, 0.0
    %v1106 = vsel %vm246, %v1098, 0.0
    %v1107 = vsel %vm247, %v1101, 0.0
    %v1108 = vsel %vm247, %v1102, 0.0
    %v1109 = vsel %vm246, %v1099, 0.0
    %v1110 = vsel %vm246, %v1100, 0.0
    %v1111 = vsel %vm247, %v1103, 0.0
    %v1112 = vsel %vm247, %v1104, 0.0
    %v1113 = vrot.slane %v1033, 2
    %v1114 = vrot.slane %v1034, 2
    %v1115 = vrot.slane %v1037, 2
    %v1116 = vrot.slane %v1038, 2
    %v1117 = vrot.slane %v1035, 2
    %v1118 = vrot.slane %v1036, 2
    %v1119 = vrot.slane %v1039, 2
    %v1120 = vrot.slane %v1040, 2
    %v1121 = vsel %vm256, %v1113, %v1117
    %v1122 = vsel %vm256, %v1114, %v1118
    %v1123 = vsel %vm256, %v1115, %v1119
    %v1124 = vsel %vm256, %v1116, %v1120
    %v1125 = vsel %vm256, %v1117, %v1113
    %v1126 = vsel %vm256, %v1118, %v1114
    %v1127 = vsel %vm256, %v1119, %v1115
    %v1128 = vsel %vm256, %v1120, %v1116
    %v1129 = vsel %vm261, %v1121, 0.0
    %v1130 = vsel %vm261, %v1122, 0.0
    %v1131 = vsel %vm262, %v1125, 0.0
    %v1132 = vsel %vm262, %v1126, 0.0
    %v1133 = vsel %vm261, %v1123, 0.0
    %v1134 = vsel %vm261, %v1124, 0.0
    %v1135 = vsel %vm262, %v1127, 0.0
    %v1136 = vsel %vm262, %v1128, 0.0
    %v1137 = vpack.c.bf16 %v1059, %v1057
    %v1138 = vpack.c.bf16 %v1060, %v1058
    %v1139 = vpack.c.bf16 %v1063, %v1061
    %v1140 = vpack.c.bf16 %v1064, %v1062
    %v1141 = vpack.c.bf16 %v1083, %v1081
    %v1142 = vpack.c.bf16 %v1084, %v1082
    %v1143 = vpack.c.bf16 %v1087, %v1085
    %v1144 = vpack.c.bf16 %v1088, %v1086
    %v1145 = vpack.c.bf16 %v1035, %v1033
    %v1146 = vpack.c.bf16 %v1036, %v1034
    %v1147 = vpack.c.bf16 %v1039, %v1037
    %v1148 = vpack.c.bf16 %v1040, %v1038
    %v1149 = vpack.c.bf16 %v1107, %v1105
    %v1150 = vpack.c.bf16 %v1108, %v1106
    %v1151 = vpack.c.bf16 %v1111, %v1109
    %v1152 = vpack.c.bf16 %v1112, %v1110
    %v1153 = vpack.c.bf16 %v1131, %v1129
    %v1154 = vpack.c.bf16 %v1132, %v1130
    %v1155 = vpack.c.bf16 %v1135, %v1133
    %v1156 = vpack.c.bf16 %v1136, %v1134
    %v1157 = vld [vmem:[%s3] sm:$0xf]
    %v1158 = vld [vmem:[%s3 + $0x4] sm:$0xf]
    %v1159 = vld [vmem:[%s3 + $0x8] sm:$0xf]
    %v1160 = vld [vmem:[%s3 + $0xc] sm:$0xf]
    %v1161 = vld [vmem:[%s3 + $0x10] sm:$0xf]
    %v1162 = vld [vmem:[%s3 + $0x14] sm:$0xf]
    %v1163 = vld [vmem:[%s3 + $0x18] sm:$0xf]
    %v1164 = vld [vmem:[%s3 + $0x1c] sm:$0xf]
    %v1165 = vld [vmem:[%s3 + $0x20] sm:$0xf]
    %v1166 = vld [vmem:[%s3 + $0x24] sm:$0xf]
    %v1167 = vld [vmem:[%s3 + $0x28] sm:$0xf]
    %v1168 = vld [vmem:[%s3 + $0x2c] sm:$0xf]
    %v1169 = vld [vmem:[%s3 + $0x30] sm:$0xf]
    %v1170 = vld [vmem:[%s3 + $0x34] sm:$0xf]
    %v1171 = vld [vmem:[%s3 + $0x38] sm:$0xf]
    %v1172 = vld [vmem:[%s3 + $0x3c] sm:$0xf]
    %v1173 = vld [vmem:[%s3 + $0x40] sm:$0xf]
    %v1174 = vld [vmem:[%s3 + $0x44] sm:$0xf]
    %v1175 = vld [vmem:[%s3 + $0x48] sm:$0xf]
    %v1176 = vld [vmem:[%s3 + $0x4c] sm:$0xf]
    %v1177 = vld [vmem:[%s3 + $0x50] sm:$0xf]
    %v1178 = vld [vmem:[%s3 + $0x54] sm:$0xf]
    %v1179 = vld [vmem:[%s3 + $0x58] sm:$0xf]
    %v1180 = vld [vmem:[%s3 + $0x5c] sm:$0xf]
    %v1181 = vld [vmem:[%s3 + $0x60] sm:$0xf]
    %v1182 = vld [vmem:[%s3 + $0x64] sm:$0xf]
    %v1183 = vld [vmem:[%s3 + $0x68] sm:$0xf]
    %v1184 = vld [vmem:[%s3 + $0x6c] sm:$0xf]
    %v1185 = vld [vmem:[%s3 + $0x70] sm:$0xf]
    %v1186 = vld [vmem:[%s3 + $0x74] sm:$0xf]
    %v1187 = vld [vmem:[%s3 + $0x78] sm:$0xf]
    %v1188 = vld [vmem:[%s3 + $0x7c] sm:$0xf]
    %v1189 = vld [vmem:[%s3 + $0x80] sm:$0xf]
    %v1190 = vld [vmem:[%s3 + $0x84] sm:$0xf]
    %v1191 = vld [vmem:[%s3 + $0x88] sm:$0xf]
    %v1192 = vld [vmem:[%s3 + $0x8c] sm:$0xf]
    %v1193 = vld [vmem:[%s3 + $0x90] sm:$0xf]
    %v1194 = vld [vmem:[%s3 + $0x94] sm:$0xf]
    %v1195 = vld [vmem:[%s3 + $0x98] sm:$0xf]
    %v1196 = vld [vmem:[%s3 + $0x9c] sm:$0xf]
    %v1197 = vld [vmem:[%s3 + $0xa0] sm:$0xf]
    %v1198 = vld [vmem:[%s3 + $0xa4] sm:$0xf]
    %v1199 = vld [vmem:[%s3 + $0xa8] sm:$0xf]
    %v1200 = vld [vmem:[%s3 + $0xac] sm:$0xf]
    %v1201 = vld [vmem:[%s3 + $0xb0] sm:$0xf]
    %v1202 = vld [vmem:[%s3 + $0xb4] sm:$0xf]
    %v1203 = vld [vmem:[%s3 + $0xb8] sm:$0xf]
    %v1204 = vld [vmem:[%s3 + $0xbc] sm:$0xf]
    %v1205 = vld [vmem:[%s3 + $0xc0] sm:$0xf]
    %v1206 = vld [vmem:[%s3 + $0xc4] sm:$0xf]
    %v1207 = vld [vmem:[%s3 + $0xc8] sm:$0xf]
    %v1208 = vld [vmem:[%s3 + $0xcc] sm:$0xf]
    %v1209 = vld [vmem:[%s3 + $0xd0] sm:$0xf]
    %v1210 = vld [vmem:[%s3 + $0xd4] sm:$0xf]
    %v1211 = vld [vmem:[%s3 + $0xd8] sm:$0xf]
    %v1212 = vld [vmem:[%s3 + $0xdc] sm:$0xf]
    %v1213 = vld [vmem:[%s3 + $0xe0] sm:$0xf]
    %v1214 = vld [vmem:[%s3 + $0xe4] sm:$0xf]
    %v1215 = vld [vmem:[%s3 + $0xe8] sm:$0xf]
    %v1216 = vld [vmem:[%s3 + $0xec] sm:$0xf]
    %v1217 = vld [vmem:[%s3 + $0xf0] sm:$0xf]
    %v1218 = vld [vmem:[%s3 + $0xf4] sm:$0xf]
    %v1219 = vld [vmem:[%s3 + $0xf8] sm:$0xf]
    %v1220 = vld [vmem:[%s3 + $0xfc] sm:$0xf]
    %v1221 = vld [vmem:[%s3 + $0x100] sm:$0xf]
    %v1222 = vld [vmem:[%s3 + $0x104] sm:$0xf]
    %v1223 = vld [vmem:[%s3 + $0x108] sm:$0xf]
    %v1224 = vld [vmem:[%s3 + $0x10c] sm:$0xf]
    %v1225 = vld [vmem:[%s3 + $0x110] sm:$0xf]
    %v1226 = vld [vmem:[%s3 + $0x114] sm:$0xf]
    %v1227 = vld [vmem:[%s3 + $0x118] sm:$0xf]
    %v1228 = vld [vmem:[%s3 + $0x11c] sm:$0xf]
    %v1229 = vld [vmem:[%s3 + $0x120] sm:$0xf]
    %v1230 = vld [vmem:[%s3 + $0x124] sm:$0xf]
    %v1231 = vld [vmem:[%s3 + $0x128] sm:$0xf]
    %v1232 = vld [vmem:[%s3 + $0x12c] sm:$0xf]
    %v1233 = vld [vmem:[%s3 + $0x130] sm:$0xf]
    %v1234 = vld [vmem:[%s3 + $0x134] sm:$0xf]
    %v1235 = vld [vmem:[%s3 + $0x138] sm:$0xf]
    %v1236 = vld [vmem:[%s3 + $0x13c] sm:$0xf]
    %v1237 = vld [vmem:[%s3 + $0x140] sm:$0xf]
    %v1238 = vld [vmem:[%s3 + $0x144] sm:$0xf]
    %v1239 = vld [vmem:[%s3 + $0x148] sm:$0xf]
    %v1240 = vld [vmem:[%s3 + $0x14c] sm:$0xf]
    %v1241 = vld [vmem:[%s3 + $0x150] sm:$0xf]
    %v1242 = vld [vmem:[%s3 + $0x154] sm:$0xf]
    %v1243 = vld [vmem:[%s3 + $0x158] sm:$0xf]
    %v1244 = vld [vmem:[%s3 + $0x15c] sm:$0xf]
    %v1245 = vld [vmem:[%s3 + $0x160] sm:$0xf]
    %v1246 = vld [vmem:[%s3 + $0x164] sm:$0xf]
    %v1247 = vld [vmem:[%s3 + $0x168] sm:$0xf]
    %v1248 = vld [vmem:[%s3 + $0x16c] sm:$0xf]
    %v1249 = vld [vmem:[%s3 + $0x170] sm:$0xf]
    %v1250 = vld [vmem:[%s3 + $0x174] sm:$0xf]
    %v1251 = vld [vmem:[%s3 + $0x178] sm:$0xf]
    %v1252 = vld [vmem:[%s3 + $0x17c] sm:$0xf]
    %v1253 = vld [vmem:[%s3 + $0x180] sm:$0xf]
    %v1254 = vld [vmem:[%s3 + $0x184] sm:$0xf]
    %v1255 = vld [vmem:[%s3 + $0x188] sm:$0xf]
    %v1256 = vld [vmem:[%s3 + $0x18c] sm:$0xf]
    %v1257 = vld [vmem:[%s3 + $0x190] sm:$0xf]
    %v1258 = vld [vmem:[%s3 + $0x194] sm:$0xf]
    %v1259 = vld [vmem:[%s3 + $0x198] sm:$0xf]
    %v1260 = vld [vmem:[%s3 + $0x19c] sm:$0xf]
    %v1261 = vld [vmem:[%s3 + $0x1a0] sm:$0xf]
    %v1262 = vld [vmem:[%s3 + $0x1a4] sm:$0xf]
    %v1263 = vld [vmem:[%s3 + $0x1a8] sm:$0xf]
    %v1264 = vld [vmem:[%s3 + $0x1ac] sm:$0xf]
    %v1265 = vld [vmem:[%s3 + $0x1b0] sm:$0xf]
    %v1266 = vld [vmem:[%s3 + $0x1b4] sm:$0xf]
    %v1267 = vld [vmem:[%s3 + $0x1b8] sm:$0xf]
    %v1268 = vld [vmem:[%s3 + $0x1bc] sm:$0xf]
    %v1269 = vld [vmem:[%s3 + $0x1c0] sm:$0xf]
    %v1270 = vld [vmem:[%s3 + $0x1c4] sm:$0xf]
    %v1271 = vld [vmem:[%s3 + $0x1c8] sm:$0xf]
    %v1272 = vld [vmem:[%s3 + $0x1cc] sm:$0xf]
    %v1273 = vld [vmem:[%s3 + $0x1d0] sm:$0xf]
    %v1274 = vld [vmem:[%s3 + $0x1d4] sm:$0xf]
    %v1275 = vld [vmem:[%s3 + $0x1d8] sm:$0xf]
    %v1276 = vld [vmem:[%s3 + $0x1dc] sm:$0xf]
    %v1277 = vld [vmem:[%s3 + $0x1e0] sm:$0xf]
    %v1278 = vld [vmem:[%s3 + $0x1e4] sm:$0xf]
    %v1279 = vld [vmem:[%s3 + $0x1e8] sm:$0xf]
    %v1280 = vld [vmem:[%s3 + $0x1ec] sm:$0xf]
    %v1281 = vld [vmem:[%s3 + $0x1f0] sm:$0xf]
    %v1282 = vld [vmem:[%s3 + $0x1f4] sm:$0xf]
    %v1283 = vld [vmem:[%s3 + $0x1f8] sm:$0xf]
    %v1284 = vld [vmem:[%s3 + $0x1fc] sm:$0xf]
    %v1285 = vld [vmem:[%s3 + $0x200] sm:$0xf]
    %v1286 = vld [vmem:[%s3 + $0x204] sm:$0xf]
    %v1287 = vld [vmem:[%s3 + $0x208] sm:$0xf]
    %v1288 = vld [vmem:[%s3 + $0x20c] sm:$0xf]
    %v1289 = vld [vmem:[%s3 + $0x210] sm:$0xf]
    %v1290 = vld [vmem:[%s3 + $0x214] sm:$0xf]
    %v1291 = vld [vmem:[%s3 + $0x218] sm:$0xf]
    %v1292 = vld [vmem:[%s3 + $0x21c] sm:$0xf]
    %v1293 = vld [vmem:[%s3 + $0x220] sm:$0xf]
    %v1294 = vld [vmem:[%s3 + $0x224] sm:$0xf]
    %v1295 = vld [vmem:[%s3 + $0x228] sm:$0xf]
    %v1296 = vld [vmem:[%s3 + $0x22c] sm:$0xf]
    %v1297 = vld [vmem:[%s3 + $0x230] sm:$0xf]
    %v1298 = vld [vmem:[%s3 + $0x234] sm:$0xf]
    %v1299 = vld [vmem:[%s3 + $0x238] sm:$0xf]
    %v1300 = vld [vmem:[%s3 + $0x23c] sm:$0xf]
    %v1301 = vld [vmem:[%s3 + $0x240] sm:$0xf]
    %v1302 = vld [vmem:[%s3 + $0x244] sm:$0xf]
    %v1303 = vld [vmem:[%s3 + $0x248] sm:$0xf]
    %v1304 = vld [vmem:[%s3 + $0x24c] sm:$0xf]
    %v1305 = vld [vmem:[%s3 + $0x250] sm:$0xf]
    %v1306 = vld [vmem:[%s3 + $0x254] sm:$0xf]
    %v1307 = vld [vmem:[%s3 + $0x258] sm:$0xf]
    %v1308 = vld [vmem:[%s3 + $0x25c] sm:$0xf]
    %v1309 = vld [vmem:[%s3 + $0x260] sm:$0xf]
    %v1310 = vld [vmem:[%s3 + $0x264] sm:$0xf]
    %v1311 = vld [vmem:[%s3 + $0x268] sm:$0xf]
    %v1312 = vld [vmem:[%s3 + $0x26c] sm:$0xf]
    %v1313 = vld [vmem:[%s3 + $0x270] sm:$0xf]
    %v1314 = vld [vmem:[%s3 + $0x274] sm:$0xf]
    %v1315 = vld [vmem:[%s3 + $0x278] sm:$0xf]
    %v1316 = vld [vmem:[%s3 + $0x27c] sm:$0xf]
    %v1477 = vunpack.c.l.b16 %v1157
    %v1478 = vunpack.c.l.b16 %v1158
    %v1479 = vunpack.c.l.b16 %v1159
    %v1480 = vunpack.c.l.b16 %v1160
    %v1481 = vunpack.c.l.b16 %v1161
    %v1482 = vunpack.c.l.b16 %v1162
    %v1483 = vunpack.c.l.b16 %v1163
    %v1484 = vunpack.c.l.b16 %v1164
    %v1485 = vunpack.c.l.b16 %v1165
    %v1486 = vunpack.c.l.b16 %v1166
    %v1487 = vunpack.c.l.b16 %v1167
    %v1488 = vunpack.c.l.b16 %v1168
    %v1489 = vunpack.c.l.b16 %v1169
    %v1490 = vunpack.c.l.b16 %v1170
    %v1491 = vunpack.c.l.b16 %v1171
    %v1492 = vunpack.c.l.b16 %v1172
    %v1493 = vunpack.c.l.b16 %v1173
    %v1494 = vunpack.c.l.b16 %v1174
    %v1495 = vunpack.c.l.b16 %v1175
    %v1496 = vunpack.c.l.b16 %v1176
    %v1497 = vunpack.c.l.b16 %v1177
    %v1498 = vunpack.c.l.b16 %v1178
    %v1499 = vunpack.c.l.b16 %v1179
    %v1500 = vunpack.c.l.b16 %v1180
    %v1501 = vunpack.c.l.b16 %v1181
    %v1502 = vunpack.c.l.b16 %v1182
    %v1503 = vunpack.c.l.b16 %v1183
    %v1504 = vunpack.c.l.b16 %v1184
    %v1505 = vunpack.c.l.b16 %v1185
    %v1506 = vunpack.c.l.b16 %v1186
    %v1507 = vunpack.c.l.b16 %v1187
    %v1508 = vunpack.c.l.b16 %v1188
    %v1509 = vunpack.c.l.b16 %v1189
    %v1510 = vunpack.c.l.b16 %v1190
    %v1511 = vunpack.c.l.b16 %v1191
    %v1512 = vunpack.c.l.b16 %v1192
    %v1513 = vunpack.c.l.b16 %v1193
    %v1514 = vunpack.c.l.b16 %v1194
    %v1515 = vunpack.c.l.b16 %v1195
    %v1516 = vunpack.c.l.b16 %v1196
    %v1517 = vunpack.c.l.b16 %v1197
    %v1518 = vunpack.c.l.b16 %v1198
    %v1519 = vunpack.c.l.b16 %v1199
    %v1520 = vunpack.c.l.b16 %v1200
    %v1521 = vunpack.c.l.b16 %v1201
    %v1522 = vunpack.c.l.b16 %v1202
    %v1523 = vunpack.c.l.b16 %v1203
    %v1524 = vunpack.c.l.b16 %v1204
    %v1525 = vunpack.c.l.b16 %v1205
    %v1526 = vunpack.c.l.b16 %v1206
    %v1527 = vunpack.c.l.b16 %v1207
    %v1528 = vunpack.c.l.b16 %v1208
    %v1529 = vunpack.c.l.b16 %v1209
    %v1530 = vunpack.c.l.b16 %v1210
    %v1531 = vunpack.c.l.b16 %v1211
    %v1532 = vunpack.c.l.b16 %v1212
    %v1533 = vunpack.c.l.b16 %v1213
    %v1534 = vunpack.c.l.b16 %v1214
    %v1535 = vunpack.c.l.b16 %v1215
    %v1536 = vunpack.c.l.b16 %v1216
    %v1537 = vunpack.c.l.b16 %v1217
    %v1538 = vunpack.c.l.b16 %v1218
    %v1539 = vunpack.c.l.b16 %v1219
    %v1540 = vunpack.c.l.b16 %v1220
    %v1541 = vunpack.c.l.b16 %v1221
    %v1542 = vunpack.c.l.b16 %v1222
    %v1543 = vunpack.c.l.b16 %v1223
    %v1544 = vunpack.c.l.b16 %v1224
    %v1545 = vunpack.c.l.b16 %v1225
    %v1546 = vunpack.c.l.b16 %v1226
    %v1547 = vunpack.c.l.b16 %v1227
    %v1548 = vunpack.c.l.b16 %v1228
    %v1549 = vunpack.c.l.b16 %v1229
    %v1550 = vunpack.c.l.b16 %v1230
    %v1551 = vunpack.c.l.b16 %v1231
    %v1552 = vunpack.c.l.b16 %v1232
    %v1553 = vunpack.c.l.b16 %v1233
    %v1554 = vunpack.c.l.b16 %v1234
    %v1555 = vunpack.c.l.b16 %v1235
    %v1556 = vunpack.c.l.b16 %v1236
    %v1557 = vunpack.c.l.b16 %v1237
    %v1558 = vunpack.c.l.b16 %v1238
    %v1559 = vunpack.c.l.b16 %v1239
    %v1560 = vunpack.c.l.b16 %v1240
    %v1561 = vunpack.c.l.b16 %v1241
    %v1562 = vunpack.c.l.b16 %v1242
    %v1563 = vunpack.c.l.b16 %v1243
    %v1564 = vunpack.c.l.b16 %v1244
    %v1565 = vunpack.c.l.b16 %v1245
    %v1566 = vunpack.c.l.b16 %v1246
    %v1567 = vunpack.c.l.b16 %v1247
    %v1568 = vunpack.c.l.b16 %v1248
    %v1569 = vunpack.c.l.b16 %v1249
    %v1570 = vunpack.c.l.b16 %v1250
    %v1571 = vunpack.c.l.b16 %v1251
    %v1572 = vunpack.c.l.b16 %v1252
    %v1573 = vunpack.c.l.b16 %v1253
    %v1574 = vunpack.c.l.b16 %v1254
    %v1575 = vunpack.c.l.b16 %v1255
    %v1576 = vunpack.c.l.b16 %v1256
    %v1577 = vunpack.c.l.b16 %v1257
    %v1578 = vunpack.c.l.b16 %v1258
    %v1579 = vunpack.c.l.b16 %v1259
    %v1580 = vunpack.c.l.b16 %v1260
    %v1581 = vunpack.c.l.b16 %v1261
    %v1582 = vunpack.c.l.b16 %v1262
    %v1583 = vunpack.c.l.b16 %v1263
    %v1584 = vunpack.c.l.b16 %v1264
    %v1585 = vunpack.c.l.b16 %v1265
    %v1586 = vunpack.c.l.b16 %v1266
    %v1587 = vunpack.c.l.b16 %v1267
    %v1588 = vunpack.c.l.b16 %v1268
    %v1589 = vunpack.c.l.b16 %v1269
    %v1590 = vunpack.c.l.b16 %v1270
    %v1591 = vunpack.c.l.b16 %v1271
    %v1592 = vunpack.c.l.b16 %v1272
    %v1593 = vunpack.c.l.b16 %v1273
    %v1594 = vunpack.c.l.b16 %v1274
    %v1595 = vunpack.c.l.b16 %v1275
    %v1596 = vunpack.c.l.b16 %v1276
    %v1597 = vunpack.c.l.b16 %v1277
    %v1598 = vunpack.c.l.b16 %v1278
    %v1599 = vunpack.c.l.b16 %v1279
    %v1600 = vunpack.c.l.b16 %v1280
    %v1601 = vunpack.c.l.b16 %v1281
    %v1602 = vunpack.c.l.b16 %v1282
    %v1603 = vunpack.c.l.b16 %v1283
    %v1604 = vunpack.c.l.b16 %v1284
    %v1605 = vunpack.c.l.b16 %v1285
    %v1606 = vunpack.c.l.b16 %v1286
    %v1607 = vunpack.c.l.b16 %v1287
    %v1608 = vunpack.c.l.b16 %v1288
    %v1609 = vunpack.c.l.b16 %v1289
    %v1610 = vunpack.c.l.b16 %v1290
    %v1611 = vunpack.c.l.b16 %v1291
    %v1612 = vunpack.c.l.b16 %v1292
    %v1613 = vunpack.c.l.b16 %v1293
    %v1614 = vunpack.c.l.b16 %v1294
    %v1615 = vunpack.c.l.b16 %v1295
    %v1616 = vunpack.c.l.b16 %v1296
    %v1617 = vunpack.c.l.b16 %v1297
    %v1618 = vunpack.c.l.b16 %v1298
    %v1619 = vunpack.c.l.b16 %v1299
    %v1620 = vunpack.c.l.b16 %v1300
    %v1621 = vunpack.c.l.b16 %v1301
    %v1622 = vunpack.c.l.b16 %v1302
    %v1623 = vunpack.c.l.b16 %v1303
    %v1624 = vunpack.c.l.b16 %v1304
    %v1625 = vunpack.c.l.b16 %v1305
    %v1626 = vunpack.c.l.b16 %v1306
    %v1627 = vunpack.c.l.b16 %v1307
    %v1628 = vunpack.c.l.b16 %v1308
    %v1629 = vunpack.c.l.b16 %v1309
    %v1630 = vunpack.c.l.b16 %v1310
    %v1631 = vunpack.c.l.b16 %v1311
    %v1632 = vunpack.c.l.b16 %v1312
    %v1633 = vunpack.c.l.b16 %v1313
    %v1634 = vunpack.c.l.b16 %v1314
    %v1635 = vunpack.c.l.b16 %v1315
    %v1636 = vunpack.c.l.b16 %v1316
    %v1637 = vpack.c.b16 %v1478, %v1477
    %v1638 = vpack.c.b16 %v1480, %v1479
    %v1639 = vpack.c.b16 %v1482, %v1481
    %v1640 = vpack.c.b16 %v1484, %v1483
    %v1641 = vpack.c.b16 %v1486, %v1485
    %v1642 = vpack.c.b16 %v1488, %v1487
    %v1643 = vpack.c.b16 %v1490, %v1489
    %v1644 = vpack.c.b16 %v1492, %v1491
    %v1645 = vpack.c.b16 %v1494, %v1493
    %v1646 = vpack.c.b16 %v1496, %v1495
    %v1647 = vpack.c.b16 %v1498, %v1497
    %v1648 = vpack.c.b16 %v1500, %v1499
    %v1649 = vpack.c.b16 %v1502, %v1501
    %v1650 = vpack.c.b16 %v1504, %v1503
    %v1651 = vpack.c.b16 %v1506, %v1505
    %v1652 = vpack.c.b16 %v1508, %v1507
    %v1653 = vpack.c.b16 %v1510, %v1509
    %v1654 = vpack.c.b16 %v1512, %v1511
    %v1655 = vpack.c.b16 %v1514, %v1513
    %v1656 = vpack.c.b16 %v1516, %v1515
    %v1657 = vpack.c.b16 %v1518, %v1517
    %v1658 = vpack.c.b16 %v1520, %v1519
    %v1659 = vpack.c.b16 %v1522, %v1521
    %v1660 = vpack.c.b16 %v1524, %v1523
    %v1661 = vpack.c.b16 %v1526, %v1525
    %v1662 = vpack.c.b16 %v1528, %v1527
    %v1663 = vpack.c.b16 %v1530, %v1529
    %v1664 = vpack.c.b16 %v1532, %v1531
    %v1665 = vpack.c.b16 %v1534, %v1533
    %v1666 = vpack.c.b16 %v1536, %v1535
    %v1667 = vpack.c.b16 %v1538, %v1537
    %v1668 = vpack.c.b16 %v1540, %v1539
    %v1669 = vpack.c.b16 %v1542, %v1541
    %v1670 = vpack.c.b16 %v1544, %v1543
    %v1671 = vpack.c.b16 %v1546, %v1545
    %v1672 = vpack.c.b16 %v1548, %v1547
    %v1673 = vpack.c.b16 %v1550, %v1549
    %v1674 = vpack.c.b16 %v1552, %v1551
    %v1675 = vpack.c.b16 %v1554, %v1553
    %v1676 = vpack.c.b16 %v1556, %v1555
    %v1677 = vpack.c.b16 %v1558, %v1557
    %v1678 = vpack.c.b16 %v1560, %v1559
    %v1679 = vpack.c.b16 %v1562, %v1561
    %v1680 = vpack.c.b16 %v1564, %v1563
    %v1681 = vpack.c.b16 %v1566, %v1565
    %v1682 = vpack.c.b16 %v1568, %v1567
    %v1683 = vpack.c.b16 %v1570, %v1569
    %v1684 = vpack.c.b16 %v1572, %v1571
    %v1685 = vpack.c.b16 %v1574, %v1573
    %v1686 = vpack.c.b16 %v1576, %v1575
    %v1687 = vpack.c.b16 %v1578, %v1577
    %v1688 = vpack.c.b16 %v1580, %v1579
    %v1689 = vpack.c.b16 %v1582, %v1581
    %v1690 = vpack.c.b16 %v1584, %v1583
    %v1691 = vpack.c.b16 %v1586, %v1585
    %v1692 = vpack.c.b16 %v1588, %v1587
    %v1693 = vpack.c.b16 %v1590, %v1589
    %v1694 = vpack.c.b16 %v1592, %v1591
    %v1695 = vpack.c.b16 %v1594, %v1593
    %v1696 = vpack.c.b16 %v1596, %v1595
    %v1697 = vpack.c.b16 %v1598, %v1597
    %v1698 = vpack.c.b16 %v1600, %v1599
    %v1699 = vpack.c.b16 %v1602, %v1601
    %v1700 = vpack.c.b16 %v1604, %v1603
    %v1701 = vpack.c.b16 %v1606, %v1605
    %v1702 = vpack.c.b16 %v1608, %v1607
    %v1703 = vpack.c.b16 %v1610, %v1609
    %v1704 = vpack.c.b16 %v1612, %v1611
    %v1705 = vpack.c.b16 %v1614, %v1613
    %v1706 = vpack.c.b16 %v1616, %v1615
    %v1707 = vpack.c.b16 %v1618, %v1617
    %v1708 = vpack.c.b16 %v1620, %v1619
    %v1709 = vpack.c.b16 %v1622, %v1621
    %v1710 = vpack.c.b16 %v1624, %v1623
    %v1711 = vpack.c.b16 %v1626, %v1625
    %v1712 = vpack.c.b16 %v1628, %v1627
    %v1713 = vpack.c.b16 %v1630, %v1629
    %v1714 = vpack.c.b16 %v1632, %v1631
    %v1715 = vpack.c.b16 %v1634, %v1633
    %v1716 = vpack.c.b16 %v1636, %v1635
    %1797 = vmatprep.subr.bf16.mxu0 0
    %1798 = vmatpush1.bf16.msra.mxu0 %v1637
    %1799 = vmatprep.subr.bf16.mxu0 0
    %1800 = vmatpush1.bf16.msra.mxu0 %v1638
    %1801 = vmatprep.subr.bf16.mxu0 0
    %1802 = vmatpush1.bf16.msra.mxu0 %v1639
    %1803 = vmatprep.subr.bf16.mxu0 0
    %1804 = vmatpush1.bf16.msra.mxu0 %v1640
    %1805 = vmatprep.subr.bf16.mxu0 0
    %1806 = vmatpush1.bf16.msra.mxu0 %v1641
    %1807 = vmatprep.subr.bf16.mxu0 0
    %1808 = vmatpush1.bf16.msra.mxu0 %v1642
    %1809 = vmatprep.subr.bf16.mxu0 0
    %1810 = vmatpush1.bf16.msra.mxu0 %v1643
    %1811 = vmatprep.subr.bf16.mxu0 0
    %1812 = vmatpush1.bf16.msra.mxu0 %v1644
    %1813 = vmatprep.subr.bf16.mxu0 0
    %1814 = vmatpush1.bf16.msra.mxu0 %v1645
    %1815 = vmatprep.subr.bf16.mxu0 0
    %1816 = vmatpush1.bf16.msra.mxu0 %v1646
    %1817 = vmatprep.subr.bf16.mxu0 0
    %1818 = vmatpush1.bf16.msra.mxu0 %v1647
    %1819 = vmatprep.subr.bf16.mxu0 0
    %1820 = vmatpush1.bf16.msra.mxu0 %v1648
    %1821 = vmatprep.subr.bf16.mxu0 0
    %1822 = vmatpush1.bf16.msra.mxu0 %v1649
    %1823 = vmatprep.subr.bf16.mxu0 0
    %1824 = vmatpush1.bf16.msra.mxu0 %v1650
    %1825 = vmatprep.subr.bf16.mxu0 0
    %1826 = vmatpush1.bf16.msra.mxu0 %v1651
    %1827 = vmatprep.subr.bf16.mxu0 0
    %1828 = vmatpush1.bf16.msra.mxu0 %v1652
    %1829 = vmatprep.mubr.bf16.mxu0 %v1138
    %1830 = vmatmul.mubr.bf16.gmra.mrb[0].mxu0 %v1137
    %v1831 = vpop.f32.mrb[0].mxu0
    %v1832 = vadd.f32 0.0, %v1831
    %v1833 = vpop.f32.mrb[0].mxu0
    %v1834 = vpop.f32.mrb[0].mxu0
    %v1835 = vadd.f32 0.0, %v1834
    %v1836 = vpop.f32.mrb[0].mxu0
    %1837 = vmatprep.mubr.bf16.mxu0 %v1140
    %1838 = vmatmul.mubr.bf16.gmra.mrb[0].mxu0 %v1139
    %v1839 = vpop.f32.mrb[0].mxu0
    %v1840 = vadd.f32 0.0, %v1839
    %v1841 = vpop.f32.mrb[0].mxu0
    %v1842 = vpop.f32.mrb[0].mxu0
    %v1843 = vadd.f32 0.0, %v1842
    %v1844 = vpop.f32.mrb[0].mxu0
    %1845 = vdwg.mxu0
    %1846 = vmatprep.subr.bf16.mxu0 0
    %1847 = vmatpush1.bf16.msra.mxu0 %v1653
    %1848 = vmatprep.subr.bf16.mxu0 0
    %1849 = vmatpush1.bf16.msra.mxu0 %v1654
    %1850 = vmatprep.subr.bf16.mxu0 0
    %1851 = vmatpush1.bf16.msra.mxu0 %v1655
    %1852 = vmatprep.subr.bf16.mxu0 0
    %1853 = vmatpush1.bf16.msra.mxu0 %v1656
    %1854 = vmatprep.subr.bf16.mxu0 0
    %1855 = vmatpush1.bf16.msra.mxu0 %v1657
    %1856 = vmatprep.subr.bf16.mxu0 0
    %1857 = vmatpush1.bf16.msra.mxu0 %v1658
    %1858 = vmatprep.subr.bf16.mxu0 0
    %1859 = vmatpush1.bf16.msra.mxu0 %v1659
    %1860 = vmatprep.subr.bf16.mxu0 0
    %1861 = vmatpush1.bf16.msra.mxu0 %v1660
    %1862 = vmatprep.subr.bf16.mxu0 0
    %1863 = vmatpush1.bf16.msra.mxu0 %v1661
    %1864 = vmatprep.subr.bf16.mxu0 0
    %1865 = vmatpush1.bf16.msra.mxu0 %v1662
    %1866 = vmatprep.subr.bf16.mxu0 0
    %1867 = vmatpush1.bf16.msra.mxu0 %v1663
    %1868 = vmatprep.subr.bf16.mxu0 0
    %1869 = vmatpush1.bf16.msra.mxu0 %v1664
    %1870 = vmatprep.subr.bf16.mxu0 0
    %1871 = vmatpush1.bf16.msra.mxu0 %v1665
    %1872 = vmatprep.subr.bf16.mxu0 0
    %1873 = vmatpush1.bf16.msra.mxu0 %v1666
    %1874 = vmatprep.subr.bf16.mxu0 0
    %1875 = vmatpush1.bf16.msra.mxu0 %v1667
    %1876 = vmatprep.subr.bf16.mxu0 0
    %1877 = vmatpush1.bf16.msra.mxu0 %v1668
    %1878 = vmatprep.mubr.bf16.mxu0 %v1142
    %1879 = vmatmul.mubr.bf16.gmra.mrb[0].mxu0 %v1141
    %v1880 = vpop.f32.mrb[0].mxu0
    %v1881 = vadd.f32 %v1832, %v1880
    %v1882 = vpop.f32.mrb[0].mxu0
    %v1883 = vpop.f32.mrb[0].mxu0
    %v1884 = vadd.f32 %v1835, %v1883
    %v1885 = vpop.f32.mrb[0].mxu0
    %1886 = vmatprep.mubr.bf16.mxu0 %v1144
    %1887 = vmatmul.mubr.bf16.gmra.mrb[0].mxu0 %v1143
    %v1888 = vpop.f32.mrb[0].mxu0
    %v1889 = vadd.f32 %v1840, %v1888
    %v1890 = vpop.f32.mrb[0].mxu0
    %v1891 = vpop.f32.mrb[0].mxu0
    %v1892 = vadd.f32 %v1843, %v1891
    %v1893 = vpop.f32.mrb[0].mxu0
    %1894 = vdwg.mxu0
    %1895 = vmatprep.subr.bf16.mxu0 0
    %1896 = vmatpush1.bf16.msra.mxu0 %v1669
    %1897 = vmatprep.subr.bf16.mxu0 0
    %1898 = vmatpush1.bf16.msra.mxu0 %v1670
    %1899 = vmatprep.subr.bf16.mxu0 0
    %1900 = vmatpush1.bf16.msra.mxu0 %v1671
    %1901 = vmatprep.subr.bf16.mxu0 0
    %1902 = vmatpush1.bf16.msra.mxu0 %v1672
    %1903 = vmatprep.subr.bf16.mxu0 0
    %1904 = vmatpush1.bf16.msra.mxu0 %v1673
    %1905 = vmatprep.subr.bf16.mxu0 0
    %1906 = vmatpush1.bf16.msra.mxu0 %v1674
    %1907 = vmatprep.subr.bf16.mxu0 0
    %1908 = vmatpush1.bf16.msra.mxu0 %v1675
    %1909 = vmatprep.subr.bf16.mxu0 0
    %1910 = vmatpush1.bf16.msra.mxu0 %v1676
    %1911 = vmatprep.subr.bf16.mxu0 0
    %1912 = vmatpush1.bf16.msra.mxu0 %v1677
    %1913 = vmatprep.subr.bf16.mxu0 0
    %1914 = vmatpush1.bf16.msra.mxu0 %v1678
    %1915 = vmatprep.subr.bf16.mxu0 0
    %1916 = vmatpush1.bf16.msra.mxu0 %v1679
    %1917 = vmatprep.subr.bf16.mxu0 0
    %1918 = vmatpush1.bf16.msra.mxu0 %v1680
    %1919 = vmatprep.subr.bf16.mxu0 0
    %1920 = vmatpush1.bf16.msra.mxu0 %v1681
    %1921 = vmatprep.subr.bf16.mxu0 0
    %1922 = vmatpush1.bf16.msra.mxu0 %v1682
    %1923 = vmatprep.subr.bf16.mxu0 0
    %1924 = vmatpush1.bf16.msra.mxu0 %v1683
    %1925 = vmatprep.subr.bf16.mxu0 0
    %1926 = vmatpush1.bf16.msra.mxu0 %v1684
    %1927 = vmatprep.mubr.bf16.mxu0 %v1146
    %1928 = vmatmul.mubr.bf16.gmra.mrb[0].mxu0 %v1145
    %v1929 = vpop.f32.mrb[0].mxu0
    %v1930 = vadd.f32 %v1881, %v1929
    %v1931 = vpop.f32.mrb[0].mxu0
    %v1932 = vpop.f32.mrb[0].mxu0
    %v1933 = vadd.f32 %v1884, %v1932
    %v1934 = vpop.f32.mrb[0].mxu0
    %1935 = vmatprep.mubr.bf16.mxu0 %v1148
    %1936 = vmatmul.mubr.bf16.gmra.mrb[0].mxu0 %v1147
    %v1937 = vpop.f32.mrb[0].mxu0
    %v1938 = vadd.f32 %v1889, %v1937
    %v1939 = vpop.f32.mrb[0].mxu0
    %v1940 = vpop.f32.mrb[0].mxu0
    %v1941 = vadd.f32 %v1892, %v1940
    %v1942 = vpop.f32.mrb[0].mxu0
    %1943 = vdwg.mxu0
    %1944 = vmatprep.subr.bf16.mxu0 0
    %1945 = vmatpush1.bf16.msra.mxu0 %v1685
    %1946 = vmatprep.subr.bf16.mxu0 0
    %1947 = vmatpush1.bf16.msra.mxu0 %v1686
    %1948 = vmatprep.subr.bf16.mxu0 0
    %1949 = vmatpush1.bf16.msra.mxu0 %v1687
    %1950 = vmatprep.subr.bf16.mxu0 0
    %1951 = vmatpush1.bf16.msra.mxu0 %v1688
    %1952 = vmatprep.subr.bf16.mxu0 0
    %1953 = vmatpush1.bf16.msra.mxu0 %v1689
    %1954 = vmatprep.subr.bf16.mxu0 0
    %1955 = vmatpush1.bf16.msra.mxu0 %v1690
    %1956 = vmatprep.subr.bf16.mxu0 0
    %1957 = vmatpush1.bf16.msra.mxu0 %v1691
    %1958 = vmatprep.subr.bf16.mxu0 0
    %1959 = vmatpush1.bf16.msra.mxu0 %v1692
    %1960 = vmatprep.subr.bf16.mxu0 0
    %1961 = vmatpush1.bf16.msra.mxu0 %v1693
    %1962 = vmatprep.subr.bf16.mxu0 0
    %1963 = vmatpush1.bf16.msra.mxu0 %v1694
    %1964 = vmatprep.subr.bf16.mxu0 0
    %1965 = vmatpush1.bf16.msra.mxu0 %v1695
    %1966 = vmatprep.subr.bf16.mxu0 0
    %1967 = vmatpush1.bf16.msra.mxu0 %v1696
    %1968 = vmatprep.subr.bf16.mxu0 0
    %1969 = vmatpush1.bf16.msra.mxu0 %v1697
    %1970 = vmatprep.subr.bf16.mxu0 0
    %1971 = vmatpush1.bf16.msra.mxu0 %v1698
    %1972 = vmatprep.subr.bf16.mxu0 0
    %1973 = vmatpush1.bf16.msra.mxu0 %v1699
    %1974 = vmatprep.subr.bf16.mxu0 0
    %1975 = vmatpush1.bf16.msra.mxu0 %v1700
    %1976 = vmatprep.mubr.bf16.mxu0 %v1150
    %1977 = vmatmul.mubr.bf16.gmra.mrb[0].mxu0 %v1149
    %v1978 = vpop.f32.mrb[0].mxu0
    %v1979 = vadd.f32 %v1930, %v1978
    %v1980 = vpop.f32.mrb[0].mxu0
    %v1981 = vpop.f32.mrb[0].mxu0
    %v1982 = vadd.f32 %v1933, %v1981
    %v1983 = vpop.f32.mrb[0].mxu0
    %1984 = vmatprep.mubr.bf16.mxu0 %v1152
    %1985 = vmatmul.mubr.bf16.gmra.mrb[0].mxu0 %v1151
    %v1986 = vpop.f32.mrb[0].mxu0
    %v1987 = vadd.f32 %v1938, %v1986
    %v1988 = vpop.f32.mrb[0].mxu0
    %v1989 = vpop.f32.mrb[0].mxu0
    %v1990 = vadd.f32 %v1941, %v1989
    %v1991 = vpop.f32.mrb[0].mxu0
    %1992 = vdwg.mxu0
    %1993 = vmatprep.subr.bf16.mxu0 0
    %1994 = vmatpush1.bf16.msra.mxu0 %v1701
    %1995 = vmatprep.subr.bf16.mxu0 0
    %1996 = vmatpush1.bf16.msra.mxu0 %v1702
    %1997 = vmatprep.subr.bf16.mxu0 0
    %1998 = vmatpush1.bf16.msra.mxu0 %v1703
    %1999 = vmatprep.subr.bf16.mxu0 0
    %2000 = vmatpush1.bf16.msra.mxu0 %v1704
    %2001 = vmatprep.subr.bf16.mxu0 0
    %2002 = vmatpush1.bf16.msra.mxu0 %v1705
    %2003 = vmatprep.subr.bf16.mxu0 0
    %2004 = vmatpush1.bf16.msra.mxu0 %v1706
    %2005 = vmatprep.subr.bf16.mxu0 0
    %2006 = vmatpush1.bf16.msra.mxu0 %v1707
    %2007 = vmatprep.subr.bf16.mxu0 0
    %2008 = vmatpush1.bf16.msra.mxu0 %v1708
    %2009 = vmatprep.subr.bf16.mxu0 0
    %2010 = vmatpush1.bf16.msra.mxu0 %v1709
    %2011 = vmatprep.subr.bf16.mxu0 0
    %2012 = vmatpush1.bf16.msra.mxu0 %v1710
    %2013 = vmatprep.subr.bf16.mxu0 0
    %2014 = vmatpush1.bf16.msra.mxu0 %v1711
    %2015 = vmatprep.subr.bf16.mxu0 0
    %2016 = vmatpush1.bf16.msra.mxu0 %v1712
    %2017 = vmatprep.subr.bf16.mxu0 0
    %2018 = vmatpush1.bf16.msra.mxu0 %v1713
    %2019 = vmatprep.subr.bf16.mxu0 0
    %2020 = vmatpush1.bf16.msra.mxu0 %v1714
    %2021 = vmatprep.subr.bf16.mxu0 0
    %2022 = vmatpush1.bf16.msra.mxu0 %v1715
    %2023 = vmatprep.subr.bf16.mxu0 0
    %2024 = vmatpush1.bf16.msra.mxu0 %v1716
    %2025 = vmatprep.mubr.bf16.mxu0 %v1154
    %2026 = vmatmul.mubr.bf16.gmra.mrb[0].mxu0 %v1153
    %v2027 = vpop.f32.mrb[0].mxu0
    %v2028 = vadd.f32 %v1979, %v2027
    %v2029 = vpop.f32.mrb[0].mxu0
    %v2030 = vpop.f32.mrb[0].mxu0
    %v2031 = vadd.f32 %v1982, %v2030
    %v2032 = vpop.f32.mrb[0].mxu0
    %2033 = vmatprep.mubr.bf16.mxu0 %v1156
    %2034 = vmatmul.mubr.bf16.gmra.mrb[0].mxu0 %v1155
    %v2035 = vpop.f32.mrb[0].mxu0
    %v2036 = vadd.f32 %v1987, %v2035
    %v2037 = vpop.f32.mrb[0].mxu0
    %v2038 = vpop.f32.mrb[0].mxu0
    %v2039 = vadd.f32 %v1990, %v2038
    %v2040 = vpop.f32.mrb[0].mxu0
    %2041 = vdwg.mxu0
    %v2042 = vadd.f32 %v2028, %v2031
    %v2043 = vadd.f32 %v2042, %v2036
    %v2044 = vadd.f32 %v2043, %v2039
    %v2045 = vrot.slane %v2044, 4
    %v2046 = vadd.f32 %v2044, %v2045
    %v2047 = vrot.slane %v2046, 2
    %v2048 = vadd.f32 %v2046, %v2047
    %v2049 = vrot.slane %v2048, 1
    %v2050 = vadd.f32 %v2048, %v2049
    %v2051 = vmul.f32 %v2050, %v169
    %v2052 = vsub.f32 %v2028, %v2051
    %v2053 = vsub.f32 %v2031, %v2051
    %v2054 = vsub.f32 %v2036, %v2051
    %v2055 = vsub.f32 %v2039, %v2051
    %v2056 = vmul.f32 %v2052, %v2052
    %v2057 = vmul.f32 %v2053, %v2053
    %v2058 = vmul.f32 %v2054, %v2054
    %v2059 = vmul.f32 %v2055, %v2055
    %v2060 = vadd.f32 %v2056, %v2057
    %v2061 = vadd.f32 %v2060, %v2058
    %v2062 = vadd.f32 %v2061, %v2059
    %v2063 = vrot.slane %v2062, 4
    %v2064 = vadd.f32 %v2062, %v2063
    %v2065 = vrot.slane %v2064, 2
    %v2066 = vadd.f32 %v2064, %v2065
    %v2067 = vrot.slane %v2066, 1
    %v2068 = vadd.f32 %v2066, %v2067
    %v2069 = vmul.f32 %v2068, %v169
    %v2070 = vadd.f32 %v2069, 1e-05
    %v2071 = vrsqrt.pop %v2070
    %v2072 = vmul.f32 %v28, %v2071
    %v2073 = vmul.f32 %v2052, %v2072
    %v2074 = vmul.f32 %v2053, %v2072
    %v2075 = vmul.f32 %v2054, %v2072
    %v2076 = vmul.f32 %v2055, %v2072
    %v2077 = vadd.f32 %v2073, %v29
    %v2078 = vadd.f32 %v2074, %v29
    %v2079 = vadd.f32 %v2075, %v29
    %v2080 = vadd.f32 %v2076, %v29
    %v2081 = vmax.f32 %v2077, 0.0
    %v2082 = vmax.f32 %v2078, 0.0
    %v2083 = vmax.f32 %v2079, 0.0
    %v2084 = vmax.f32 %v2080, 0.0
    %v2085 = vmax.f32 %v2081, %v2082
    %v2086 = vrot.slane %v2085, 4
    %v2087 = vmax.f32 %v2085, %v2086
    %v2088 = vrot.slane %v2087, 2
    %v2089 = vmax.f32 %v2087, %v2088
    %v2090 = vrot.slane %v2089, 1
    %v2091 = vmax.f32 %v2089, %v2090
    %v2092 = vmax.f32 %v2083, %v2084
    %v2093 = vrot.slane %v2092, 4
    %v2094 = vmax.f32 %v2092, %v2093
    %v2095 = vrot.slane %v2094, 2
    %v2096 = vmax.f32 %v2094, %v2095
    %v2097 = vrot.slane %v2096, 1
    %v2098 = vmax.f32 %v2096, %v2097
    %v2099 = vpack.c.bf16 %v2091, %v2091
    %v2100 = vpack.c.bf16 %v2098, %v2098
    %s2101 = scalar_lea.vmem %s1, 64
    %v2102 = vld [vmem:[%s2101] sm:$0xf]
    %v2103 = vld [vmem:[%s2101 + $0x4] sm:$0xf]
    %v2104 = vld [vmem:[%s2101 + $0x8] sm:$0xf]
    %v2105 = vld [vmem:[%s2101 + $0xc] sm:$0xf]
    %v2106 = vld [vmem:[%s2101 + $0x10] sm:$0xf]
    %v2107 = vld [vmem:[%s2101 + $0x14] sm:$0xf]
    %v2108 = vld [vmem:[%s2101 + $0x18] sm:$0xf]
    %v2109 = vld [vmem:[%s2101 + $0x1c] sm:$0xf]
    %v2110 = vld [vmem:[%s2101 + $0x20] sm:$0xf]
    %v2111 = vld [vmem:[%s2101 + $0x24] sm:$0xf]
    %v2112 = vld [vmem:[%s2101 + $0x28] sm:$0xf]
    %v2113 = vld [vmem:[%s2101 + $0x2c] sm:$0xf]
    %v2114 = vld [vmem:[%s2101 + $0x30] sm:$0xf]
    %v2115 = vld [vmem:[%s2101 + $0x34] sm:$0xf]
    %v2116 = vld [vmem:[%s2101 + $0x38] sm:$0xf]
    %v2117 = vld [vmem:[%s2101 + $0x3c] sm:$0xf]
    %v2120 = vunpack.c.l.b16 %v2099
    %v2121 = vunpack.c.l.b16 %v2100
    %vm2122 = vcmask 1041409
    %v2123 = vsel %vm2122, %v2121, %v2120
    %v2124 = vpack.c.b16 %v2123, %v2123
    %v2142 = vunpack.c.l.b16 %v2102
    %v2143 = vunpack.c.l.b16 %v2103
    %v2144 = vunpack.c.l.b16 %v2104
    %v2145 = vunpack.c.l.b16 %v2105
    %v2146 = vunpack.c.l.b16 %v2106
    %v2147 = vunpack.c.l.b16 %v2107
    %v2148 = vunpack.c.l.b16 %v2108
    %v2149 = vunpack.c.l.b16 %v2109
    %v2150 = vunpack.c.l.b16 %v2110
    %v2151 = vunpack.c.l.b16 %v2111
    %v2152 = vunpack.c.l.b16 %v2112
    %v2153 = vunpack.c.l.b16 %v2113
    %v2154 = vunpack.c.l.b16 %v2114
    %v2155 = vunpack.c.l.b16 %v2115
    %v2156 = vunpack.c.l.b16 %v2116
    %v2157 = vunpack.c.l.b16 %v2117
    %v2158 = vpack.c.b16 %v2143, %v2142
    %v2159 = vpack.c.b16 %v2145, %v2144
    %v2160 = vpack.c.b16 %v2147, %v2146
    %v2161 = vpack.c.b16 %v2149, %v2148
    %v2162 = vpack.c.b16 %v2151, %v2150
    %v2163 = vpack.c.b16 %v2153, %v2152
    %v2164 = vpack.c.b16 %v2155, %v2154
    %v2165 = vpack.c.b16 %v2157, %v2156
    %2174 = vmatprep.subr.bf16.mxu0 0
    %2175 = vmatpush1.bf16.msra.mxu0 %v2158
    %2176 = vmatprep.subr.bf16.mxu0 0
    %2177 = vmatpush1.bf16.msra.mxu0 %v2159
    %2178 = vmatprep.subr.bf16.mxu0 0
    %2179 = vmatpush1.bf16.msra.mxu0 %v2160
    %2180 = vmatprep.subr.bf16.mxu0 0
    %2181 = vmatpush1.bf16.msra.mxu0 %v2161
    %2182 = vmatprep.subr.bf16.mxu0 0
    %2183 = vmatpush1.bf16.msra.mxu0 %v2162
    %2184 = vmatprep.subr.bf16.mxu0 0
    %2185 = vmatpush1.bf16.msra.mxu0 %v2163
    %2186 = vmatprep.subr.bf16.mxu0 0
    %2187 = vmatpush1.bf16.msra.mxu0 %v2164
    %2188 = vmatprep.subr.bf16.mxu0 0
    %2189 = vmatpush1.bf16.msra.mxu0 %v2165
    %2190 = vmatprep.subr.bf16.mxu0 0
    %2191 = vmatpush1.bf16.msra.mxu0 0
    %2192 = vmatprep.subr.bf16.mxu0 0
    %2193 = vmatpush1.bf16.msra.mxu0 0
    %2194 = vmatprep.subr.bf16.mxu0 0
    %2195 = vmatpush1.bf16.msra.mxu0 0
    %2196 = vmatprep.subr.bf16.mxu0 0
    %2197 = vmatpush1.bf16.msra.mxu0 0
    %2198 = vmatprep.subr.bf16.mxu0 0
    %2199 = vmatpush1.bf16.msra.mxu0 0
    %2200 = vmatprep.subr.bf16.mxu0 0
    %2201 = vmatpush1.bf16.msra.mxu0 0
    %2202 = vmatprep.subr.bf16.mxu0 0
    %2203 = vmatpush1.bf16.msra.mxu0 0
    %2204 = vmatprep.subr.bf16.mxu0 0
    %2205 = vmatpush1.bf16.msra.mxu0 0
    %2206 = vmatprep.mubr.bf16.mxu0 0
    %2207 = vmatmul.mubr.bf16.gmra.mrb[0].mxu0 %v2124
    %v2208 = vpop.f32.mrb[0].mxu0
    %v2209 = vadd.f32 %v30, %v2208
    %v2210 = vpop.f32.mrb[0].mxu0
    %v2211 = vpop.f32.mrb[0].mxu0
    %v2212 = vpop.f32.mrb[0].mxu0
    %2213 = vdwg.mxu0
    %2214 = vst [vmem:[#allocation2] sm:$0x3] %v2209
    // Predicated region
    $region22: #{basic_fcn_forward.1} parent=1 // pred_check
      _
    $region23: #{basic_fcn_forward.1} parent=1 // pred_check_branch
      %2216 = sbr.rel (0) target = $region25
    $region24: #{basic_fcn_forward.1} parent=1 // pred_region
      %s2218 = ssub.s32 32, 32
      %2219 = vsyncadd [#allocation3], %s2218
      %s2221 = sshll.u32 [#allocation2], 4
      %s2222 = int_to_ptr.vmem [resolvable:$true] %s2221
      %2224 = dma.vmem_to_hbm [thread:$0]  %s2222, 32, %s5, [#allocation3]
    $region25: #{basic_fcn_forward.1} parent=1 // pred_fallthru
      _
    // Predicated region
    $region26: #{basic_fcn_forward.1} parent=1 // pred_check
      _
    $region27: #{basic_fcn_forward.1} parent=1 // pred_check_branch
      %2226 = sbr.rel (0) target = $region29
    $region28: #{basic_fcn_forward.1} parent=1 // pred_region
      %2227 = dma.done [#allocation3], 32
    $region29: #{basic_fcn_forward.1} parent=1 // pred_fallthru
      _
    %2228 = vsyncpa [#allocation3], 1

</llo_original>
